<compile_context>
chip_gen: v7x
topology: tpu7x:2x2x1
jax: 0.10.0
libtpu: 0.0.40
codegen_flags: <defaults>
</compile_context>

<pallas_src>
import jax
import jax.numpy as jnp
from jax.experimental import pallas as pl
from jax.experimental.pallas import tpu as pltpu


# ---------------------------------------------------------------------------
# Fused Pallas kernel
# ---------------------------------------------------------------------------
def _make_fused_kernel(n_hyper_hidden, trunk_dims, constraint):
    """Fused hypernetwork + per-sample trunk MLP.

    ref layout (per grid step, all VMEM blocks):
      refs[0]                 data_grid   (TB, input_dim)
      refs[1]                 data_sensor (TB, num_sensor)
      next 2*n_hyper_hidden   hyper hidden (W (in,out), b (1,out)) pairs
      next 4*len(trunk_dims)  per trunk layer:
          ww (wh, in*out)  columns of the last hyper Linear producing the
                           trunk weight block, permuted to (in,out) row-major
          wb (1,  in*out)  matching bias columns
          bw (wh, out)     columns producing the trunk bias
          bb (1,  out)     matching bias columns
      refs[-1]                output      (TB, output_dim)
    """

    def kernel(*refs):
        grid_ref, sensor_ref = refs[0], refs[1]
        out_ref = refs[-1]
        pos = 2

        # ---- hypernetwork hidden stack (MXU matmuls + tanh) ----
        h = sensor_ref[...]
        for _ in range(n_hyper_hidden):
            w = refs[pos][...]
            b = refs[pos + 1][...]
            pos += 2
            h = jnp.tanh(jnp.dot(h, w, preferred_element_type=jnp.float32) + b)

        # ---- trunk MLP with weights generated on the fly ----
        # The last hyper Linear is applied block-by-block (a column partition
        # of the original matmul), so the flat (TB, param_size) parameter
        # vector never leaves VMEM and is never materialized as one tensor.
        x = grid_ref[...]
        n_layers = len(trunk_dims)
        for li, (n_in, n_out) in enumerate(trunk_dims):
            ww = refs[pos][...]
            wb = refs[pos + 1][...]
            bw = refs[pos + 2][...]
            bb = refs[pos + 3][...]
            pos += 4
            # generated flat weight block, (in, out) row-major -> the per-b
            # chunks below are lane-contiguous.
            w_flat = jnp.dot(h, ww, preferred_element_type=jnp.float32) + wb
            acc = jnp.dot(h, bw, preferred_element_type=jnp.float32) + bb
            # out[a, c] = bias[a, c] + sum_b x[a, b] * w[a, b, c]
            for b_idx in range(n_in):
                acc = acc + x[:, b_idx:b_idx + 1] * \
                    w_flat[:, b_idx * n_out:(b_idx + 1) * n_out]
            x = jnp.tanh(acc) if li < n_layers - 1 else acc

        if constraint:
            x = jnp.maximum(x, 0.0)
        out_ref[...] = x.astype(out_ref.dtype)

    return kernel


# ---------------------------------------------------------------------------
# hyperdeeponet (JAX/Pallas wrapper)
# ---------------------------------------------------------------------------
class HyperDeepONet:
    # TODO(synk): only 'tanh' activations are wired (the torch module also
    # allows 'relu'/'prelu' via constructor strings).

    def __init__(self, depth_trunk, width_trunk, depth_hyper, width_hyper,
                 num_sensor, input_dim, num_basis, output_dim,
                 constraint=False, key=None):
        # trunk FC layer (in, out) dims, matching the torch module
        self.trunk_dims = [(input_dim, width_trunk)]
        for _ in range(depth_trunk - 1):
            self.trunk_dims.append((width_trunk, width_trunk))
        self.trunk_dims.append((width_trunk, num_basis))
        self.trunk_dims.append((num_basis, output_dim))
        self.param_sizes = [ni * no + no for (ni, no) in self.trunk_dims]
        self.param_size = int(sum(self.param_sizes))
        self.constraint = constraint
        self.input_dim = input_dim
        self.num_sensor = num_sensor
        self.output_dim = output_dim

        # hyper net: depth_hyper tanh-activated Linears, then Linear(wh, param_size)
        self.hyper_hidden_dims = [(num_sensor, width_hyper)]
        for _ in range(depth_hyper - 1):
            self.hyper_hidden_dims.append((width_hyper, width_hyper))
        self.hyper_out_dims = (width_hyper, self.param_size)

        key = jax.random.PRNGKey(0) if key is None else key

        def init_linear(k, ni, no):
            kw, kb = jax.random.split(k)
            scale = 1.0 / jnp.sqrt(jnp.float32(ni))
            w = jax.random.uniform(kw, (ni, no), jnp.float32, -scale, scale)
            b = jax.random.uniform(kb, (1, no), jnp.float32, -scale, scale)
            return w, b

        self.hyper_hidden_params = []
        for (ni, no) in self.hyper_hidden_dims:
            key, sub = jax.random.split(key)
            self.hyper_hidden_params.append(init_linear(sub, ni, no))
        key, sub = jax.random.split(key)
        self.hyper_out_w, self.hyper_out_b = init_linear(
            sub, self.hyper_out_dims[0], self.hyper_out_dims[1])

        # One-time column split/permute of the last hyper Linear so each trunk
        # layer's generated weight block comes out in (in, out) row-major
        # order (lane-dense chunks in the kernel).  Pure relabeling: the
        # forward math is unchanged.
        self.trunk_blocks = []
        cut = 0
        for (ni, no) in self.trunk_dims:
            wsz = ni * no
            perm = jnp.arange(wsz).reshape(no, ni).T.reshape(-1)
            ww = self.hyper_out_w[:, cut:cut + wsz][:, perm]   # (wh, ni*no)
            wb = self.hyper_out_b[:, cut:cut + wsz][:, perm]   # (1,  ni*no)
            bw = self.hyper_out_w[:, cut + wsz:cut + wsz + no]  # (wh, no)
            bb = self.hyper_out_b[:, cut + wsz:cut + wsz + no]  # (1,  no)
            self.trunk_blocks.append((ww, wb, bw, bb))
            cut += wsz + no

    # ---- batch tile size from a VMEM budget (keeps v7x's 64 MiB happy) ----
    def _pick_tile_b(self, B):
        per_row_bytes = 4 * (2 * self.param_size
                             + 4 * max(no for _, no in self.trunk_dims)
                             + 4 * max(no for _, no in self.hyper_hidden_dims))
        cap = max(8, (8 * 1024 * 1024) // per_row_bytes)   # ~8 MiB of live rows
        if B <= cap:
            return B                                        # single full block
        tile = min(256, (cap // 8) * 8)
        return max(8, tile)

    # ---- full forward (single fused pallas_call) ----
    def __call__(self, data_grid, data_sensor, tile_b=None):
        B = data_grid.shape[0]
        tile_b = self._pick_tile_b(B) if tile_b is None else tile_b
        grid = (pl.cdiv(B, tile_b),)

        const = lambda i: (0, 0)          # shared weights stay resident
        batched = lambda i: (i, 0)        # batch-tiled tensors

        args = [data_grid, data_sensor]
        in_specs = [
            pl.BlockSpec((tile_b, self.input_dim), batched),
            pl.BlockSpec((tile_b, self.num_sensor), batched),
        ]
        for (w, b) in self.hyper_hidden_params:
            args.extend([w, b])
            in_specs.extend([pl.BlockSpec(w.shape, const),
                             pl.BlockSpec(b.shape, const)])
        for blk in self.trunk_blocks:
            args.extend(blk)
            in_specs.extend([pl.BlockSpec(t.shape, const) for t in blk])

        kernel = _make_fused_kernel(len(self.hyper_hidden_params),
                                    self.trunk_dims, self.constraint)

        # advisory cost estimate for the XLA scheduler
        hyper_flops = 2 * B * sum(ni * no for ni, no in self.hyper_hidden_dims)
        hyper_flops += 2 * B * self.hyper_out_dims[0] * self.hyper_out_dims[1]
        trunk_flops = 2 * B * sum(ni * no for ni, no in self.trunk_dims)
        transcendentals = B * (sum(no for _, no in self.hyper_hidden_dims)
                               + sum(no for _, no in self.trunk_dims[:-1]))
        bytes_accessed = 4 * (sum(int(a.size) for a in args)
                              + B * self.output_dim)

        return pl.pallas_call(
            kernel,
            out_shape=jax.ShapeDtypeStruct((B, self.output_dim), jnp.float32),
            grid=grid,
            in_specs=in_specs,
            out_specs=pl.BlockSpec((tile_b, self.output_dim), batched),
            compiler_params=pltpu.CompilerParams(
                dimension_semantics=("parallel",)),
            cost_estimate=pl.CostEstimate(
                flops=int(hyper_flops + trunk_flops),
                transcendentals=int(transcendentals),
                bytes_accessed=int(bytes_accessed)),
        )(*args)

    # ---- pure-JAX reference (mirrors the torch forward & layout) ----
    def reference(self, data_grid, data_sensor):
        h = data_sensor
        for (w, b) in self.hyper_hidden_params:
            h = jnp.tanh(h @ w + b)
        weight = h @ self.hyper_out_w + self.hyper_out_b   # (B, param_size)

        B = data_grid.shape[0]
        x = data_grid
        cut = 0
        n_layers = len(self.trunk_dims)
        for li, ((ni, no), psz) in enumerate(zip(self.trunk_dims,
                                                 self.param_sizes)):
            p = weight[:, cut:cut + psz]
            w = p[:, :no * ni].reshape(B, no, ni)
            b = p[:, no * ni:].reshape(B, no)
            x = jnp.einsum('ab,acb->ac', x, w) + b
            if li < n_layers - 1:
                x = jnp.tanh(x)
            cut += psz
        if self.constraint:
            x = jnp.maximum(x, 0.0)
        return x


# ---------------------------------------------------------------------------
if __name__ == "__main__":
    # small config: depth_trunk=2, width_trunk=32, depth_hyper=2,
    # width_hyper=32, num_sensor=16, input_dim=2, num_basis=16, output_dim=1
    B = 8
    model = HyperDeepONet(
        depth_trunk=2, width_trunk=32,
        depth_hyper=2, width_hyper=32,
        num_sensor=16, input_dim=2, num_basis=16, output_dim=1,
        constraint=False, key=jax.random.PRNGKey(0),
    )

    key = jax.random.PRNGKey(0)
    kg, ks = jax.random.split(key)
    data_grid = jax.random.normal(kg, (B, 2), jnp.float32)
    data_sensor = jax.random.normal(ks, (B, 16), jnp.float32)

    out = jax.block_until_ready(model(data_grid, data_sensor))
    ref = model.reference(data_grid, data_sensor)
    assert out.shape == (B, 1), out.shape
    assert jnp.allclose(out, ref, atol=2e-3, rtol=2e-3), (
        float(jnp.max(jnp.abs(out - ref))))

    # also exercise the batch-tiled grid (grid > 1, padded last block)
    B2 = 20
    kg2, ks2 = jax.random.split(jax.random.PRNGKey(1))
    dg2 = jax.random.normal(kg2, (B2, 2), jnp.float32)
    ds2 = jax.random.normal(ks2, (B2, 16), jnp.float32)
    out2 = jax.block_until_ready(model(dg2, ds2, tile_b=8))
    ref2 = model.reference(dg2, ds2)
    assert out2.shape == (B2, 1), out2.shape
    assert jnp.allclose(out2, ref2, atol=2e-3, rtol=2e-3), (
        float(jnp.max(jnp.abs(out2 - ref2))))

    print("KERNEL_OK")
</pallas_src>

<mosaic_0001>
module attributes {stable_mosaic.version = 11 : i64} {
  func.func @kernel(%arg0: i32, %arg1: memref<8x2xf32, #tpu.memory_space<vmem>>, %arg2: memref<8x16xf32, #tpu.memory_space<vmem>>, %arg3: memref<16x32xf32, #tpu.memory_space<vmem>>, %arg4: memref<1x32xf32, #tpu.memory_space<vmem>>, %arg5: memref<32x32xf32, #tpu.memory_space<vmem>>, %arg6: memref<1x32xf32, #tpu.memory_space<vmem>>, %arg7: memref<32x64xf32, #tpu.memory_space<vmem>>, %arg8: memref<1x64xf32, #tpu.memory_space<vmem>>, %arg9: memref<32x32xf32, #tpu.memory_space<vmem>>, %arg10: memref<1x32xf32, #tpu.memory_space<vmem>>, %arg11: memref<32x1024xf32, #tpu.memory_space<vmem>>, %arg12: memref<1x1024xf32, #tpu.memory_space<vmem>>, %arg13: memref<32x32xf32, #tpu.memory_space<vmem>>, %arg14: memref<1x32xf32, #tpu.memory_space<vmem>>, %arg15: memref<32x512xf32, #tpu.memory_space<vmem>>, %arg16: memref<1x512xf32, #tpu.memory_space<vmem>>, %arg17: memref<32x16xf32, #tpu.memory_space<vmem>>, %arg18: memref<1x16xf32, #tpu.memory_space<vmem>>, %arg19: memref<32x16xf32, #tpu.memory_space<vmem>>, %arg20: memref<1x16xf32, #tpu.memory_space<vmem>>, %arg21: memref<32x1xf32, #tpu.memory_space<vmem>>, %arg22: memref<1x1xf32, #tpu.memory_space<vmem>>, %arg23: memref<8x1xf32, #tpu.memory_space<vmem>>) attributes {dimension_semantics = [#tpu.dimension_semantics<parallel>], iteration_bounds = array<i64: 1>, scalar_prefetch = 0 : i64, scratch_operands = 0 : i64, tpu.core_type = #tpu.core_type<tc>, window_params = [{transform_indices = @transform_0, window_bounds = array<i64: 8, 2>}, {transform_indices = @transform_1, window_bounds = array<i64: 8, 16>}, {pipeline_mode = #tpu.pipeline_mode<synchronous>, transform_indices = @transform_2, window_bounds = array<i64: 16, 32>}, {pipeline_mode = #tpu.pipeline_mode<synchronous>, transform_indices = @transform_3, window_bounds = array<i64: 1, 32>}, {pipeline_mode = #tpu.pipeline_mode<synchronous>, transform_indices = @transform_4, window_bounds = array<i64: 32, 32>}, {pipeline_mode = #tpu.pipeline_mode<synchronous>, transform_indices = @transform_5, window_bounds = array<i64: 1, 32>}, {pipeline_mode = #tpu.pipeline_mode<synchronous>, transform_indices = @transform_6, window_bounds = array<i64: 32, 64>}, {pipeline_mode = #tpu.pipeline_mode<synchronous>, transform_indices = @transform_7, window_bounds = array<i64: 1, 64>}, {pipeline_mode = #tpu.pipeline_mode<synchronous>, transform_indices = @transform_8, window_bounds = array<i64: 32, 32>}, {pipeline_mode = #tpu.pipeline_mode<synchronous>, transform_indices = @transform_9, window_bounds = array<i64: 1, 32>}, {pipeline_mode = #tpu.pipeline_mode<synchronous>, transform_indices = @transform_10, window_bounds = array<i64: 32, 1024>}, {pipeline_mode = #tpu.pipeline_mode<synchronous>, transform_indices = @transform_11, window_bounds = array<i64: 1, 1024>}, {pipeline_mode = #tpu.pipeline_mode<synchronous>, transform_indices = @transform_12, window_bounds = array<i64: 32, 32>}, {pipeline_mode = #tpu.pipeline_mode<synchronous>, transform_indices = @transform_13, window_bounds = array<i64: 1, 32>}, {pipeline_mode = #tpu.pipeline_mode<synchronous>, transform_indices = @transform_14, window_bounds = array<i64: 32, 512>}, {pipeline_mode = #tpu.pipeline_mode<synchronous>, transform_indices = @transform_15, window_bounds = array<i64: 1, 512>}, {pipeline_mode = #tpu.pipeline_mode<synchronous>, transform_indices = @transform_16, window_bounds = array<i64: 32, 16>}, {pipeline_mode = #tpu.pipeline_mode<synchronous>, transform_indices = @transform_17, window_bounds = array<i64: 1, 16>}, {pipeline_mode = #tpu.pipeline_mode<synchronous>, transform_indices = @transform_18, window_bounds = array<i64: 32, 16>}, {pipeline_mode = #tpu.pipeline_mode<synchronous>, transform_indices = @transform_19, window_bounds = array<i64: 1, 16>}, {pipeline_mode = #tpu.pipeline_mode<synchronous>, transform_indices = @transform_20, window_bounds = array<i64: 32, 1>}, {pipeline_mode = #tpu.pipeline_mode<synchronous>, transform_indices = @transform_21, window_bounds = array<i64: 1, 1>}, {transform_indices = @transform_22, window_bounds = array<i64: 8, 1>}]} {
    %c0 = arith.constant 0 : index
    %c0_0 = arith.constant 0 : index
    %0 = vector.load %arg2[%c0, %c0_0] : memref<8x16xf32, #tpu.memory_space<vmem>>, vector<8x16xf32>
    %c0_1 = arith.constant 0 : index
    %c0_2 = arith.constant 0 : index
    %1 = vector.load %arg3[%c0_1, %c0_2] : memref<16x32xf32, #tpu.memory_space<vmem>>, vector<16x32xf32>
    %c0_3 = arith.constant 0 : index
    %c0_4 = arith.constant 0 : index
    %2 = vector.load %arg4[%c0_3, %c0_4] : memref<1x32xf32, #tpu.memory_space<vmem>>, vector<1x32xf32>
    %cst = arith.constant dense<0.000000e+00> : vector<8x32xf32>
    %3 = tpu.matmul %0, %1, %cst {dimension_numbers = #tpu.dot_dimension_numbers<[1], [0], [0], [1], [0, 0, 1, 1], [], []>} : vector<8x16xf32>, vector<16x32xf32>, vector<8x32xf32> -> vector<8x32xf32>
    %4 = vector.broadcast %2 : vector<1x32xf32> to vector<8x32xf32>
    %5 = arith.addf %3, %4 : vector<8x32xf32>
    %6 = math.tanh %5 : vector<8x32xf32>
    %c0_5 = arith.constant 0 : index
    %c0_6 = arith.constant 0 : index
    %7 = vector.load %arg5[%c0_5, %c0_6] : memref<32x32xf32, #tpu.memory_space<vmem>>, vector<32x32xf32>
    %c0_7 = arith.constant 0 : index
    %c0_8 = arith.constant 0 : index
    %8 = vector.load %arg6[%c0_7, %c0_8] : memref<1x32xf32, #tpu.memory_space<vmem>>, vector<1x32xf32>
    %cst_9 = arith.constant dense<0.000000e+00> : vector<8x32xf32>
    %9 = tpu.matmul %6, %7, %cst_9 {dimension_numbers = #tpu.dot_dimension_numbers<[1], [0], [0], [1], [0, 0, 1, 1], [], []>} : vector<8x32xf32>, vector<32x32xf32>, vector<8x32xf32> -> vector<8x32xf32>
    %10 = vector.broadcast %8 : vector<1x32xf32> to vector<8x32xf32>
    %11 = arith.addf %9, %10 : vector<8x32xf32>
    %12 = math.tanh %11 : vector<8x32xf32>
    %c0_10 = arith.constant 0 : index
    %c0_11 = arith.constant 0 : index
    %13 = vector.load %arg1[%c0_10, %c0_11] : memref<8x2xf32, #tpu.memory_space<vmem>>, vector<8x2xf32>
    %c0_12 = arith.constant 0 : index
    %c0_13 = arith.constant 0 : index
    %14 = vector.load %arg7[%c0_12, %c0_13] : memref<32x64xf32, #tpu.memory_space<vmem>>, vector<32x64xf32>
    %c0_14 = arith.constant 0 : index
    %c0_15 = arith.constant 0 : index
    %15 = vector.load %arg8[%c0_14, %c0_15] : memref<1x64xf32, #tpu.memory_space<vmem>>, vector<1x64xf32>
    %c0_16 = arith.constant 0 : index
    %c0_17 = arith.constant 0 : index
    %16 = vector.load %arg9[%c0_16, %c0_17] : memref<32x32xf32, #tpu.memory_space<vmem>>, vector<32x32xf32>
    %c0_18 = arith.constant 0 : index
    %c0_19 = arith.constant 0 : index
    %17 = vector.load %arg10[%c0_18, %c0_19] : memref<1x32xf32, #tpu.memory_space<vmem>>, vector<1x32xf32>
    %cst_20 = arith.constant dense<0.000000e+00> : vector<8x64xf32>
    %18 = tpu.matmul %12, %14, %cst_20 {dimension_numbers = #tpu.dot_dimension_numbers<[1], [0], [0], [1], [0, 0, 1, 1], [], []>} : vector<8x32xf32>, vector<32x64xf32>, vector<8x64xf32> -> vector<8x64xf32>
    %19 = vector.broadcast %15 : vector<1x64xf32> to vector<8x64xf32>
    %20 = arith.addf %18, %19 : vector<8x64xf32>
    %cst_21 = arith.constant dense<0.000000e+00> : vector<8x32xf32>
    %21 = tpu.matmul %12, %16, %cst_21 {dimension_numbers = #tpu.dot_dimension_numbers<[1], [0], [0], [1], [0, 0, 1, 1], [], []>} : vector<8x32xf32>, vector<32x32xf32>, vector<8x32xf32> -> vector<8x32xf32>
    %22 = vector.broadcast %17 : vector<1x32xf32> to vector<8x32xf32>
    %23 = arith.addf %21, %22 : vector<8x32xf32>
    %24 = vector.extract_strided_slice %13 {offsets = [0, 0], sizes = [8, 1], strides = [1, 1]} : vector<8x2xf32> to vector<8x1xf32>
    %25 = vector.extract_strided_slice %20 {offsets = [0, 0], sizes = [8, 32], strides = [1, 1]} : vector<8x64xf32> to vector<8x32xf32>
    %26 = vector.broadcast %24 : vector<8x1xf32> to vector<8x32xf32>
    %27 = arith.mulf %26, %25 : vector<8x32xf32>
    %28 = arith.addf %23, %27 : vector<8x32xf32>
    %29 = vector.extract_strided_slice %13 {offsets = [0, 1], sizes = [8, 1], strides = [1, 1]} : vector<8x2xf32> to vector<8x1xf32>
    %30 = vector.extract_strided_slice %20 {offsets = [0, 32], sizes = [8, 32], strides = [1, 1]} : vector<8x64xf32> to vector<8x32xf32>
    %31 = vector.broadcast %29 : vector<8x1xf32> to vector<8x32xf32>
    %32 = arith.mulf %31, %30 : vector<8x32xf32>
    %33 = arith.addf %28, %32 : vector<8x32xf32>
    %34 = math.tanh %33 : vector<8x32xf32>
    %c0_22 = arith.constant 0 : index
    %c0_23 = arith.constant 0 : index
    %35 = vector.load %arg11[%c0_22, %c0_23] : memref<32x1024xf32, #tpu.memory_space<vmem>>, vector<32x1024xf32>
    %c0_24 = arith.constant 0 : index
    %c0_25 = arith.constant 0 : index
    %36 = vector.load %arg12[%c0_24, %c0_25] : memref<1x1024xf32, #tpu.memory_space<vmem>>, vector<1x1024xf32>
    %c0_26 = arith.constant 0 : index
    %c0_27 = arith.constant 0 : index
    %37 = vector.load %arg13[%c0_26, %c0_27] : memref<32x32xf32, #tpu.memory_space<vmem>>, vector<32x32xf32>
    %c0_28 = arith.constant 0 : index
    %c0_29 = arith.constant 0 : index
    %38 = vector.load %arg14[%c0_28, %c0_29] : memref<1x32xf32, #tpu.memory_space<vmem>>, vector<1x32xf32>
    %cst_30 = arith.constant dense<0.000000e+00> : vector<8x1024xf32>
    %39 = tpu.matmul %12, %35, %cst_30 {dimension_numbers = #tpu.dot_dimension_numbers<[1], [0], [0], [1], [0, 0, 1, 1], [], []>} : vector<8x32xf32>, vector<32x1024xf32>, vector<8x1024xf32> -> vector<8x1024xf32>
    %40 = vector.broadcast %36 : vector<1x1024xf32> to vector<8x1024xf32>
    %41 = arith.addf %39, %40 : vector<8x1024xf32>
    %cst_31 = arith.constant dense<0.000000e+00> : vector<8x32xf32>
    %42 = tpu.matmul %12, %37, %cst_31 {dimension_numbers = #tpu.dot_dimension_numbers<[1], [0], [0], [1], [0, 0, 1, 1], [], []>} : vector<8x32xf32>, vector<32x32xf32>, vector<8x32xf32> -> vector<8x32xf32>
    %43 = vector.broadcast %38 : vector<1x32xf32> to vector<8x32xf32>
    %44 = arith.addf %42, %43 : vector<8x32xf32>
    %45 = vector.extract_strided_slice %34 {offsets = [0, 0], sizes = [8, 1], strides = [1, 1]} : vector<8x32xf32> to vector<8x1xf32>
    %46 = vector.extract_strided_slice %41 {offsets = [0, 0], sizes = [8, 32], strides = [1, 1]} : vector<8x1024xf32> to vector<8x32xf32>
    %47 = vector.broadcast %45 : vector<8x1xf32> to vector<8x32xf32>
    %48 = arith.mulf %47, %46 : vector<8x32xf32>
    %49 = arith.addf %44, %48 : vector<8x32xf32>
    %50 = vector.extract_strided_slice %34 {offsets = [0, 1], sizes = [8, 1], strides = [1, 1]} : vector<8x32xf32> to vector<8x1xf32>
    %51 = vector.extract_strided_slice %41 {offsets = [0, 32], sizes = [8, 32], strides = [1, 1]} : vector<8x1024xf32> to vector<8x32xf32>
    %52 = vector.broadcast %50 : vector<8x1xf32> to vector<8x32xf32>
    %53 = arith.mulf %52, %51 : vector<8x32xf32>
    %54 = arith.addf %49, %53 : vector<8x32xf32>
    %55 = vector.extract_strided_slice %34 {offsets = [0, 2], sizes = [8, 1], strides = [1, 1]} : vector<8x32xf32> to vector<8x1xf32>
    %56 = vector.extract_strided_slice %41 {offsets = [0, 64], sizes = [8, 32], strides = [1, 1]} : vector<8x1024xf32> to vector<8x32xf32>
    %57 = vector.broadcast %55 : vector<8x1xf32> to vector<8x32xf32>
    %58 = arith.mulf %57, %56 : vector<8x32xf32>
    %59 = arith.addf %54, %58 : vector<8x32xf32>
    %60 = vector.extract_strided_slice %34 {offsets = [0, 3], sizes = [8, 1], strides = [1, 1]} : vector<8x32xf32> to vector<8x1xf32>
    %61 = vector.extract_strided_slice %41 {offsets = [0, 96], sizes = [8, 32], strides = [1, 1]} : vector<8x1024xf32> to vector<8x32xf32>
    %62 = vector.broadcast %60 : vector<8x1xf32> to vector<8x32xf32>
    %63 = arith.mulf %62, %61 : vector<8x32xf32>
    %64 = arith.addf %59, %63 : vector<8x32xf32>
    %65 = vector.extract_strided_slice %34 {offsets = [0, 4], sizes = [8, 1], strides = [1, 1]} : vector<8x32xf32> to vector<8x1xf32>
    %66 = vector.extract_strided_slice %41 {offsets = [0, 128], sizes = [8, 32], strides = [1, 1]} : vector<8x1024xf32> to vector<8x32xf32>
    %67 = vector.broadcast %65 : vector<8x1xf32> to vector<8x32xf32>
    %68 = arith.mulf %67, %66 : vector<8x32xf32>
    %69 = arith.addf %64, %68 : vector<8x32xf32>
    %70 = vector.extract_strided_slice %34 {offsets = [0, 5], sizes = [8, 1], strides = [1, 1]} : vector<8x32xf32> to vector<8x1xf32>
    %71 = vector.extract_strided_slice %41 {offsets = [0, 160], sizes = [8, 32], strides = [1, 1]} : vector<8x1024xf32> to vector<8x32xf32>
    %72 = vector.broadcast %70 : vector<8x1xf32> to vector<8x32xf32>
    %73 = arith.mulf %72, %71 : vector<8x32xf32>
    %74 = arith.addf %69, %73 : vector<8x32xf32>
    %75 = vector.extract_strided_slice %34 {offsets = [0, 6], sizes = [8, 1], strides = [1, 1]} : vector<8x32xf32> to vector<8x1xf32>
    %76 = vector.extract_strided_slice %41 {offsets = [0, 192], sizes = [8, 32], strides = [1, 1]} : vector<8x1024xf32> to vector<8x32xf32>
    %77 = vector.broadcast %75 : vector<8x1xf32> to vector<8x32xf32>
    %78 = arith.mulf %77, %76 : vector<8x32xf32>
    %79 = arith.addf %74, %78 : vector<8x32xf32>
    %80 = vector.extract_strided_slice %34 {offsets = [0, 7], sizes = [8, 1], strides = [1, 1]} : vector<8x32xf32> to vector<8x1xf32>
    %81 = vector.extract_strided_slice %41 {offsets = [0, 224], sizes = [8, 32], strides = [1, 1]} : vector<8x1024xf32> to vector<8x32xf32>
    %82 = vector.broadcast %80 : vector<8x1xf32> to vector<8x32xf32>
    %83 = arith.mulf %82, %81 : vector<8x32xf32>
    %84 = arith.addf %79, %83 : vector<8x32xf32>
    %85 = vector.extract_strided_slice %34 {offsets = [0, 8], sizes = [8, 1], strides = [1, 1]} : vector<8x32xf32> to vector<8x1xf32>
    %86 = vector.extract_strided_slice %41 {offsets = [0, 256], sizes = [8, 32], strides = [1, 1]} : vector<8x1024xf32> to vector<8x32xf32>
    %87 = vector.broadcast %85 : vector<8x1xf32> to vector<8x32xf32>
    %88 = arith.mulf %87, %86 : vector<8x32xf32>
    %89 = arith.addf %84, %88 : vector<8x32xf32>
    %90 = vector.extract_strided_slice %34 {offsets = [0, 9], sizes = [8, 1], strides = [1, 1]} : vector<8x32xf32> to vector<8x1xf32>
    %91 = vector.extract_strided_slice %41 {offsets = [0, 288], sizes = [8, 32], strides = [1, 1]} : vector<8x1024xf32> to vector<8x32xf32>
    %92 = vector.broadcast %90 : vector<8x1xf32> to vector<8x32xf32>
    %93 = arith.mulf %92, %91 : vector<8x32xf32>
    %94 = arith.addf %89, %93 : vector<8x32xf32>
    %95 = vector.extract_strided_slice %34 {offsets = [0, 10], sizes = [8, 1], strides = [1, 1]} : vector<8x32xf32> to vector<8x1xf32>
    %96 = vector.extract_strided_slice %41 {offsets = [0, 320], sizes = [8, 32], strides = [1, 1]} : vector<8x1024xf32> to vector<8x32xf32>
    %97 = vector.broadcast %95 : vector<8x1xf32> to vector<8x32xf32>
    %98 = arith.mulf %97, %96 : vector<8x32xf32>
    %99 = arith.addf %94, %98 : vector<8x32xf32>
    %100 = vector.extract_strided_slice %34 {offsets = [0, 11], sizes = [8, 1], strides = [1, 1]} : vector<8x32xf32> to vector<8x1xf32>
    %101 = vector.extract_strided_slice %41 {offsets = [0, 352], sizes = [8, 32], strides = [1, 1]} : vector<8x1024xf32> to vector<8x32xf32>
    %102 = vector.broadcast %100 : vector<8x1xf32> to vector<8x32xf32>
    %103 = arith.mulf %102, %101 : vector<8x32xf32>
    %104 = arith.addf %99, %103 : vector<8x32xf32>
    %105 = vector.extract_strided_slice %34 {offsets = [0, 12], sizes = [8, 1], strides = [1, 1]} : vector<8x32xf32> to vector<8x1xf32>
    %106 = vector.extract_strided_slice %41 {offsets = [0, 384], sizes = [8, 32], strides = [1, 1]} : vector<8x1024xf32> to vector<8x32xf32>
    %107 = vector.broadcast %105 : vector<8x1xf32> to vector<8x32xf32>
    %108 = arith.mulf %107, %106 : vector<8x32xf32>
    %109 = arith.addf %104, %108 : vector<8x32xf32>
    %110 = vector.extract_strided_slice %34 {offsets = [0, 13], sizes = [8, 1], strides = [1, 1]} : vector<8x32xf32> to vector<8x1xf32>
    %111 = vector.extract_strided_slice %41 {offsets = [0, 416], sizes = [8, 32], strides = [1, 1]} : vector<8x1024xf32> to vector<8x32xf32>
    %112 = vector.broadcast %110 : vector<8x1xf32> to vector<8x32xf32>
    %113 = arith.mulf %112, %111 : vector<8x32xf32>
    %114 = arith.addf %109, %113 : vector<8x32xf32>
    %115 = vector.extract_strided_slice %34 {offsets = [0, 14], sizes = [8, 1], strides = [1, 1]} : vector<8x32xf32> to vector<8x1xf32>
    %116 = vector.extract_strided_slice %41 {offsets = [0, 448], sizes = [8, 32], strides = [1, 1]} : vector<8x1024xf32> to vector<8x32xf32>
    %117 = vector.broadcast %115 : vector<8x1xf32> to vector<8x32xf32>
    %118 = arith.mulf %117, %116 : vector<8x32xf32>
    %119 = arith.addf %114, %118 : vector<8x32xf32>
    %120 = vector.extract_strided_slice %34 {offsets = [0, 15], sizes = [8, 1], strides = [1, 1]} : vector<8x32xf32> to vector<8x1xf32>
    %121 = vector.extract_strided_slice %41 {offsets = [0, 480], sizes = [8, 32], strides = [1, 1]} : vector<8x1024xf32> to vector<8x32xf32>
    %122 = vector.broadcast %120 : vector<8x1xf32> to vector<8x32xf32>
    %123 = arith.mulf %122, %121 : vector<8x32xf32>
    %124 = arith.addf %119, %123 : vector<8x32xf32>
    %125 = vector.extract_strided_slice %34 {offsets = [0, 16], sizes = [8, 1], strides = [1, 1]} : vector<8x32xf32> to vector<8x1xf32>
    %126 = vector.extract_strided_slice %41 {offsets = [0, 512], sizes = [8, 32], strides = [1, 1]} : vector<8x1024xf32> to vector<8x32xf32>
    %127 = vector.broadcast %125 : vector<8x1xf32> to vector<8x32xf32>
    %128 = arith.mulf %127, %126 : vector<8x32xf32>
    %129 = arith.addf %124, %128 : vector<8x32xf32>
    %130 = vector.extract_strided_slice %34 {offsets = [0, 17], sizes = [8, 1], strides = [1, 1]} : vector<8x32xf32> to vector<8x1xf32>
    %131 = vector.extract_strided_slice %41 {offsets = [0, 544], sizes = [8, 32], strides = [1, 1]} : vector<8x1024xf32> to vector<8x32xf32>
    %132 = vector.broadcast %130 : vector<8x1xf32> to vector<8x32xf32>
    %133 = arith.mulf %132, %131 : vector<8x32xf32>
    %134 = arith.addf %129, %133 : vector<8x32xf32>
    %135 = vector.extract_strided_slice %34 {offsets = [0, 18], sizes = [8, 1], strides = [1, 1]} : vector<8x32xf32> to vector<8x1xf32>
    %136 = vector.extract_strided_slice %41 {offsets = [0, 576], sizes = [8, 32], strides = [1, 1]} : vector<8x1024xf32> to vector<8x32xf32>
    %137 = vector.broadcast %135 : vector<8x1xf32> to vector<8x32xf32>
    %138 = arith.mulf %137, %136 : vector<8x32xf32>
    %139 = arith.addf %134, %138 : vector<8x32xf32>
    %140 = vector.extract_strided_slice %34 {offsets = [0, 19], sizes = [8, 1], strides = [1, 1]} : vector<8x32xf32> to vector<8x1xf32>
    %141 = vector.extract_strided_slice %41 {offsets = [0, 608], sizes = [8, 32], strides = [1, 1]} : vector<8x1024xf32> to vector<8x32xf32>
    %142 = vector.broadcast %140 : vector<8x1xf32> to vector<8x32xf32>
    %143 = arith.mulf %142, %141 : vector<8x32xf32>
    %144 = arith.addf %139, %143 : vector<8x32xf32>
    %145 = vector.extract_strided_slice %34 {offsets = [0, 20], sizes = [8, 1], strides = [1, 1]} : vector<8x32xf32> to vector<8x1xf32>
    %146 = vector.extract_strided_slice %41 {offsets = [0, 640], sizes = [8, 32], strides = [1, 1]} : vector<8x1024xf32> to vector<8x32xf32>
    %147 = vector.broadcast %145 : vector<8x1xf32> to vector<8x32xf32>
    %148 = arith.mulf %147, %146 : vector<8x32xf32>
    %149 = arith.addf %144, %148 : vector<8x32xf32>
    %150 = vector.extract_strided_slice %34 {offsets = [0, 21], sizes = [8, 1], strides = [1, 1]} : vector<8x32xf32> to vector<8x1xf32>
    %151 = vector.extract_strided_slice %41 {offsets = [0, 672], sizes = [8, 32], strides = [1, 1]} : vector<8x1024xf32> to vector<8x32xf32>
    %152 = vector.broadcast %150 : vector<8x1xf32> to vector<8x32xf32>
    %153 = arith.mulf %152, %151 : vector<8x32xf32>
    %154 = arith.addf %149, %153 : vector<8x32xf32>
    %155 = vector.extract_strided_slice %34 {offsets = [0, 22], sizes = [8, 1], strides = [1, 1]} : vector<8x32xf32> to vector<8x1xf32>
    %156 = vector.extract_strided_slice %41 {offsets = [0, 704], sizes = [8, 32], strides = [1, 1]} : vector<8x1024xf32> to vector<8x32xf32>
    %157 = vector.broadcast %155 : vector<8x1xf32> to vector<8x32xf32>
    %158 = arith.mulf %157, %156 : vector<8x32xf32>
    %159 = arith.addf %154, %158 : vector<8x32xf32>
    %160 = vector.extract_strided_slice %34 {offsets = [0, 23], sizes = [8, 1], strides = [1, 1]} : vector<8x32xf32> to vector<8x1xf32>
    %161 = vector.extract_strided_slice %41 {offsets = [0, 736], sizes = [8, 32], strides = [1, 1]} : vector<8x1024xf32> to vector<8x32xf32>
    %162 = vector.broadcast %160 : vector<8x1xf32> to vector<8x32xf32>
    %163 = arith.mulf %162, %161 : vector<8x32xf32>
    %164 = arith.addf %159, %163 : vector<8x32xf32>
    %165 = vector.extract_strided_slice %34 {offsets = [0, 24], sizes = [8, 1], strides = [1, 1]} : vector<8x32xf32> to vector<8x1xf32>
    %166 = vector.extract_strided_slice %41 {offsets = [0, 768], sizes = [8, 32], strides = [1, 1]} : vector<8x1024xf32> to vector<8x32xf32>
    %167 = vector.broadcast %165 : vector<8x1xf32> to vector<8x32xf32>
    %168 = arith.mulf %167, %166 : vector<8x32xf32>
    %169 = arith.addf %164, %168 : vector<8x32xf32>
    %170 = vector.extract_strided_slice %34 {offsets = [0, 25], sizes = [8, 1], strides = [1, 1]} : vector<8x32xf32> to vector<8x1xf32>
    %171 = vector.extract_strided_slice %41 {offsets = [0, 800], sizes = [8, 32], strides = [1, 1]} : vector<8x1024xf32> to vector<8x32xf32>
    %172 = vector.broadcast %170 : vector<8x1xf32> to vector<8x32xf32>
    %173 = arith.mulf %172, %171 : vector<8x32xf32>
    %174 = arith.addf %169, %173 : vector<8x32xf32>
    %175 = vector.extract_strided_slice %34 {offsets = [0, 26], sizes = [8, 1], strides = [1, 1]} : vector<8x32xf32> to vector<8x1xf32>
    %176 = vector.extract_strided_slice %41 {offsets = [0, 832], sizes = [8, 32], strides = [1, 1]} : vector<8x1024xf32> to vector<8x32xf32>
    %177 = vector.broadcast %175 : vector<8x1xf32> to vector<8x32xf32>
    %178 = arith.mulf %177, %176 : vector<8x32xf32>
    %179 = arith.addf %174, %178 : vector<8x32xf32>
    %180 = vector.extract_strided_slice %34 {offsets = [0, 27], sizes = [8, 1], strides = [1, 1]} : vector<8x32xf32> to vector<8x1xf32>
    %181 = vector.extract_strided_slice %41 {offsets = [0, 864], sizes = [8, 32], strides = [1, 1]} : vector<8x1024xf32> to vector<8x32xf32>
    %182 = vector.broadcast %180 : vector<8x1xf32> to vector<8x32xf32>
    %183 = arith.mulf %182, %181 : vector<8x32xf32>
    %184 = arith.addf %179, %183 : vector<8x32xf32>
    %185 = vector.extract_strided_slice %34 {offsets = [0, 28], sizes = [8, 1], strides = [1, 1]} : vector<8x32xf32> to vector<8x1xf32>
    %186 = vector.extract_strided_slice %41 {offsets = [0, 896], sizes = [8, 32], strides = [1, 1]} : vector<8x1024xf32> to vector<8x32xf32>
    %187 = vector.broadcast %185 : vector<8x1xf32> to vector<8x32xf32>
    %188 = arith.mulf %187, %186 : vector<8x32xf32>
    %189 = arith.addf %184, %188 : vector<8x32xf32>
    %190 = vector.extract_strided_slice %34 {offsets = [0, 29], sizes = [8, 1], strides = [1, 1]} : vector<8x32xf32> to vector<8x1xf32>
    %191 = vector.extract_strided_slice %41 {offsets = [0, 928], sizes = [8, 32], strides = [1, 1]} : vector<8x1024xf32> to vector<8x32xf32>
    %192 = vector.broadcast %190 : vector<8x1xf32> to vector<8x32xf32>
    %193 = arith.mulf %192, %191 : vector<8x32xf32>
    %194 = arith.addf %189, %193 : vector<8x32xf32>
    %195 = vector.extract_strided_slice %34 {offsets = [0, 30], sizes = [8, 1], strides = [1, 1]} : vector<8x32xf32> to vector<8x1xf32>
    %196 = vector.extract_strided_slice %41 {offsets = [0, 960], sizes = [8, 32], strides = [1, 1]} : vector<8x1024xf32> to vector<8x32xf32>
    %197 = vector.broadcast %195 : vector<8x1xf32> to vector<8x32xf32>
    %198 = arith.mulf %197, %196 : vector<8x32xf32>
    %199 = arith.addf %194, %198 : vector<8x32xf32>
    %200 = vector.extract_strided_slice %34 {offsets = [0, 31], sizes = [8, 1], strides = [1, 1]} : vector<8x32xf32> to vector<8x1xf32>
    %201 = vector.extract_strided_slice %41 {offsets = [0, 992], sizes = [8, 32], strides = [1, 1]} : vector<8x1024xf32> to vector<8x32xf32>
    %202 = vector.broadcast %200 : vector<8x1xf32> to vector<8x32xf32>
    %203 = arith.mulf %202, %201 : vector<8x32xf32>
    %204 = arith.addf %199, %203 : vector<8x32xf32>
    %205 = math.tanh %204 : vector<8x32xf32>
    %c0_32 = arith.constant 0 : index
    %c0_33 = arith.constant 0 : index
    %206 = vector.load %arg15[%c0_32, %c0_33] : memref<32x512xf32, #tpu.memory_space<vmem>>, vector<32x512xf32>
    %c0_34 = arith.constant 0 : index
    %c0_35 = arith.constant 0 : index
    %207 = vector.load %arg16[%c0_34, %c0_35] : memref<1x512xf32, #tpu.memory_space<vmem>>, vector<1x512xf32>
    %c0_36 = arith.constant 0 : index
    %c0_37 = arith.constant 0 : index
    %208 = vector.load %arg17[%c0_36, %c0_37] : memref<32x16xf32, #tpu.memory_space<vmem>>, vector<32x16xf32>
    %c0_38 = arith.constant 0 : index
    %c0_39 = arith.constant 0 : index
    %209 = vector.load %arg18[%c0_38, %c0_39] : memref<1x16xf32, #tpu.memory_space<vmem>>, vector<1x16xf32>
    %cst_40 = arith.constant dense<0.000000e+00> : vector<8x512xf32>
    %210 = tpu.matmul %12, %206, %cst_40 {dimension_numbers = #tpu.dot_dimension_numbers<[1], [0], [0], [1], [0, 0, 1, 1], [], []>} : vector<8x32xf32>, vector<32x512xf32>, vector<8x512xf32> -> vector<8x512xf32>
    %211 = vector.broadcast %207 : vector<1x512xf32> to vector<8x512xf32>
    %212 = arith.addf %210, %211 : vector<8x512xf32>
    %cst_41 = arith.constant dense<0.000000e+00> : vector<8x16xf32>
    %213 = tpu.matmul %12, %208, %cst_41 {dimension_numbers = #tpu.dot_dimension_numbers<[1], [0], [0], [1], [0, 0, 1, 1], [], []>} : vector<8x32xf32>, vector<32x16xf32>, vector<8x16xf32> -> vector<8x16xf32>
    %214 = vector.broadcast %209 : vector<1x16xf32> to vector<8x16xf32>
    %215 = arith.addf %213, %214 : vector<8x16xf32>
    %216 = vector.extract_strided_slice %205 {offsets = [0, 0], sizes = [8, 1], strides = [1, 1]} : vector<8x32xf32> to vector<8x1xf32>
    %217 = vector.extract_strided_slice %212 {offsets = [0, 0], sizes = [8, 16], strides = [1, 1]} : vector<8x512xf32> to vector<8x16xf32>
    %218 = vector.broadcast %216 : vector<8x1xf32> to vector<8x16xf32>
    %219 = arith.mulf %218, %217 : vector<8x16xf32>
    %220 = arith.addf %215, %219 : vector<8x16xf32>
    %221 = vector.extract_strided_slice %205 {offsets = [0, 1], sizes = [8, 1], strides = [1, 1]} : vector<8x32xf32> to vector<8x1xf32>
    %222 = vector.extract_strided_slice %212 {offsets = [0, 16], sizes = [8, 16], strides = [1, 1]} : vector<8x512xf32> to vector<8x16xf32>
    %223 = vector.broadcast %221 : vector<8x1xf32> to vector<8x16xf32>
    %224 = arith.mulf %223, %222 : vector<8x16xf32>
    %225 = arith.addf %220, %224 : vector<8x16xf32>
    %226 = vector.extract_strided_slice %205 {offsets = [0, 2], sizes = [8, 1], strides = [1, 1]} : vector<8x32xf32> to vector<8x1xf32>
    %227 = vector.extract_strided_slice %212 {offsets = [0, 32], sizes = [8, 16], strides = [1, 1]} : vector<8x512xf32> to vector<8x16xf32>
    %228 = vector.broadcast %226 : vector<8x1xf32> to vector<8x16xf32>
    %229 = arith.mulf %228, %227 : vector<8x16xf32>
    %230 = arith.addf %225, %229 : vector<8x16xf32>
    %231 = vector.extract_strided_slice %205 {offsets = [0, 3], sizes = [8, 1], strides = [1, 1]} : vector<8x32xf32> to vector<8x1xf32>
    %232 = vector.extract_strided_slice %212 {offsets = [0, 48], sizes = [8, 16], strides = [1, 1]} : vector<8x512xf32> to vector<8x16xf32>
    %233 = vector.broadcast %231 : vector<8x1xf32> to vector<8x16xf32>
    %234 = arith.mulf %233, %232 : vector<8x16xf32>
    %235 = arith.addf %230, %234 : vector<8x16xf32>
    %236 = vector.extract_strided_slice %205 {offsets = [0, 4], sizes = [8, 1], strides = [1, 1]} : vector<8x32xf32> to vector<8x1xf32>
    %237 = vector.extract_strided_slice %212 {offsets = [0, 64], sizes = [8, 16], strides = [1, 1]} : vector<8x512xf32> to vector<8x16xf32>
    %238 = vector.broadcast %236 : vector<8x1xf32> to vector<8x16xf32>
    %239 = arith.mulf %238, %237 : vector<8x16xf32>
    %240 = arith.addf %235, %239 : vector<8x16xf32>
    %241 = vector.extract_strided_slice %205 {offsets = [0, 5], sizes = [8, 1], strides = [1, 1]} : vector<8x32xf32> to vector<8x1xf32>
    %242 = vector.extract_strided_slice %212 {offsets = [0, 80], sizes = [8, 16], strides = [1, 1]} : vector<8x512xf32> to vector<8x16xf32>
    %243 = vector.broadcast %241 : vector<8x1xf32> to vector<8x16xf32>
    %244 = arith.mulf %243, %242 : vector<8x16xf32>
    %245 = arith.addf %240, %244 : vector<8x16xf32>
    %246 = vector.extract_strided_slice %205 {offsets = [0, 6], sizes = [8, 1], strides = [1, 1]} : vector<8x32xf32> to vector<8x1xf32>
    %247 = vector.extract_strided_slice %212 {offsets = [0, 96], sizes = [8, 16], strides = [1, 1]} : vector<8x512xf32> to vector<8x16xf32>
    %248 = vector.broadcast %246 : vector<8x1xf32> to vector<8x16xf32>
    %249 = arith.mulf %248, %247 : vector<8x16xf32>
    %250 = arith.addf %245, %249 : vector<8x16xf32>
    %251 = vector.extract_strided_slice %205 {offsets = [0, 7], sizes = [8, 1], strides = [1, 1]} : vector<8x32xf32> to vector<8x1xf32>
    %252 = vector.extract_strided_slice %212 {offsets = [0, 112], sizes = [8, 16], strides = [1, 1]} : vector<8x512xf32> to vector<8x16xf32>
    %253 = vector.broadcast %251 : vector<8x1xf32> to vector<8x16xf32>
    %254 = arith.mulf %253, %252 : vector<8x16xf32>
    %255 = arith.addf %250, %254 : vector<8x16xf32>
    %256 = vector.extract_strided_slice %205 {offsets = [0, 8], sizes = [8, 1], strides = [1, 1]} : vector<8x32xf32> to vector<8x1xf32>
    %257 = vector.extract_strided_slice %212 {offsets = [0, 128], sizes = [8, 16], strides = [1, 1]} : vector<8x512xf32> to vector<8x16xf32>
    %258 = vector.broadcast %256 : vector<8x1xf32> to vector<8x16xf32>
    %259 = arith.mulf %258, %257 : vector<8x16xf32>
    %260 = arith.addf %255, %259 : vector<8x16xf32>
    %261 = vector.extract_strided_slice %205 {offsets = [0, 9], sizes = [8, 1], strides = [1, 1]} : vector<8x32xf32> to vector<8x1xf32>
    %262 = vector.extract_strided_slice %212 {offsets = [0, 144], sizes = [8, 16], strides = [1, 1]} : vector<8x512xf32> to vector<8x16xf32>
    %263 = vector.broadcast %261 : vector<8x1xf32> to vector<8x16xf32>
    %264 = arith.mulf %263, %262 : vector<8x16xf32>
    %265 = arith.addf %260, %264 : vector<8x16xf32>
    %266 = vector.extract_strided_slice %205 {offsets = [0, 10], sizes = [8, 1], strides = [1, 1]} : vector<8x32xf32> to vector<8x1xf32>
    %267 = vector.extract_strided_slice %212 {offsets = [0, 160], sizes = [8, 16], strides = [1, 1]} : vector<8x512xf32> to vector<8x16xf32>
    %268 = vector.broadcast %266 : vector<8x1xf32> to vector<8x16xf32>
    %269 = arith.mulf %268, %267 : vector<8x16xf32>
    %270 = arith.addf %265, %269 : vector<8x16xf32>
    %271 = vector.extract_strided_slice %205 {offsets = [0, 11], sizes = [8, 1], strides = [1, 1]} : vector<8x32xf32> to vector<8x1xf32>
    %272 = vector.extract_strided_slice %212 {offsets = [0, 176], sizes = [8, 16], strides = [1, 1]} : vector<8x512xf32> to vector<8x16xf32>
    %273 = vector.broadcast %271 : vector<8x1xf32> to vector<8x16xf32>
    %274 = arith.mulf %273, %272 : vector<8x16xf32>
    %275 = arith.addf %270, %274 : vector<8x16xf32>
    %276 = vector.extract_strided_slice %205 {offsets = [0, 12], sizes = [8, 1], strides = [1, 1]} : vector<8x32xf32> to vector<8x1xf32>
    %277 = vector.extract_strided_slice %212 {offsets = [0, 192], sizes = [8, 16], strides = [1, 1]} : vector<8x512xf32> to vector<8x16xf32>
    %278 = vector.broadcast %276 : vector<8x1xf32> to vector<8x16xf32>
    %279 = arith.mulf %278, %277 : vector<8x16xf32>
    %280 = arith.addf %275, %279 : vector<8x16xf32>
    %281 = vector.extract_strided_slice %205 {offsets = [0, 13], sizes = [8, 1], strides = [1, 1]} : vector<8x32xf32> to vector<8x1xf32>
    %282 = vector.extract_strided_slice %212 {offsets = [0, 208], sizes = [8, 16], strides = [1, 1]} : vector<8x512xf32> to vector<8x16xf32>
    %283 = vector.broadcast %281 : vector<8x1xf32> to vector<8x16xf32>
    %284 = arith.mulf %283, %282 : vector<8x16xf32>
    %285 = arith.addf %280, %284 : vector<8x16xf32>
    %286 = vector.extract_strided_slice %205 {offsets = [0, 14], sizes = [8, 1], strides = [1, 1]} : vector<8x32xf32> to vector<8x1xf32>
    %287 = vector.extract_strided_slice %212 {offsets = [0, 224], sizes = [8, 16], strides = [1, 1]} : vector<8x512xf32> to vector<8x16xf32>
    %288 = vector.broadcast %286 : vector<8x1xf32> to vector<8x16xf32>
    %289 = arith.mulf %288, %287 : vector<8x16xf32>
    %290 = arith.addf %285, %289 : vector<8x16xf32>
    %291 = vector.extract_strided_slice %205 {offsets = [0, 15], sizes = [8, 1], strides = [1, 1]} : vector<8x32xf32> to vector<8x1xf32>
    %292 = vector.extract_strided_slice %212 {offsets = [0, 240], sizes = [8, 16], strides = [1, 1]} : vector<8x512xf32> to vector<8x16xf32>
    %293 = vector.broadcast %291 : vector<8x1xf32> to vector<8x16xf32>
    %294 = arith.mulf %293, %292 : vector<8x16xf32>
    %295 = arith.addf %290, %294 : vector<8x16xf32>
    %296 = vector.extract_strided_slice %205 {offsets = [0, 16], sizes = [8, 1], strides = [1, 1]} : vector<8x32xf32> to vector<8x1xf32>
    %297 = vector.extract_strided_slice %212 {offsets = [0, 256], sizes = [8, 16], strides = [1, 1]} : vector<8x512xf32> to vector<8x16xf32>
    %298 = vector.broadcast %296 : vector<8x1xf32> to vector<8x16xf32>
    %299 = arith.mulf %298, %297 : vector<8x16xf32>
    %300 = arith.addf %295, %299 : vector<8x16xf32>
    %301 = vector.extract_strided_slice %205 {offsets = [0, 17], sizes = [8, 1], strides = [1, 1]} : vector<8x32xf32> to vector<8x1xf32>
    %302 = vector.extract_strided_slice %212 {offsets = [0, 272], sizes = [8, 16], strides = [1, 1]} : vector<8x512xf32> to vector<8x16xf32>
    %303 = vector.broadcast %301 : vector<8x1xf32> to vector<8x16xf32>
    %304 = arith.mulf %303, %302 : vector<8x16xf32>
    %305 = arith.addf %300, %304 : vector<8x16xf32>
    %306 = vector.extract_strided_slice %205 {offsets = [0, 18], sizes = [8, 1], strides = [1, 1]} : vector<8x32xf32> to vector<8x1xf32>
    %307 = vector.extract_strided_slice %212 {offsets = [0, 288], sizes = [8, 16], strides = [1, 1]} : vector<8x512xf32> to vector<8x16xf32>
    %308 = vector.broadcast %306 : vector<8x1xf32> to vector<8x16xf32>
    %309 = arith.mulf %308, %307 : vector<8x16xf32>
    %310 = arith.addf %305, %309 : vector<8x16xf32>
    %311 = vector.extract_strided_slice %205 {offsets = [0, 19], sizes = [8, 1], strides = [1, 1]} : vector<8x32xf32> to vector<8x1xf32>
    %312 = vector.extract_strided_slice %212 {offsets = [0, 304], sizes = [8, 16], strides = [1, 1]} : vector<8x512xf32> to vector<8x16xf32>
    %313 = vector.broadcast %311 : vector<8x1xf32> to vector<8x16xf32>
    %314 = arith.mulf %313, %312 : vector<8x16xf32>
    %315 = arith.addf %310, %314 : vector<8x16xf32>
    %316 = vector.extract_strided_slice %205 {offsets = [0, 20], sizes = [8, 1], strides = [1, 1]} : vector<8x32xf32> to vector<8x1xf32>
    %317 = vector.extract_strided_slice %212 {offsets = [0, 320], sizes = [8, 16], strides = [1, 1]} : vector<8x512xf32> to vector<8x16xf32>
    %318 = vector.broadcast %316 : vector<8x1xf32> to vector<8x16xf32>
    %319 = arith.mulf %318, %317 : vector<8x16xf32>
    %320 = arith.addf %315, %319 : vector<8x16xf32>
    %321 = vector.extract_strided_slice %205 {offsets = [0, 21], sizes = [8, 1], strides = [1, 1]} : vector<8x32xf32> to vector<8x1xf32>
    %322 = vector.extract_strided_slice %212 {offsets = [0, 336], sizes = [8, 16], strides = [1, 1]} : vector<8x512xf32> to vector<8x16xf32>
    %323 = vector.broadcast %321 : vector<8x1xf32> to vector<8x16xf32>
    %324 = arith.mulf %323, %322 : vector<8x16xf32>
    %325 = arith.addf %320, %324 : vector<8x16xf32>
    %326 = vector.extract_strided_slice %205 {offsets = [0, 22], sizes = [8, 1], strides = [1, 1]} : vector<8x32xf32> to vector<8x1xf32>
    %327 = vector.extract_strided_slice %212 {offsets = [0, 352], sizes = [8, 16], strides = [1, 1]} : vector<8x512xf32> to vector<8x16xf32>
    %328 = vector.broadcast %326 : vector<8x1xf32> to vector<8x16xf32>
    %329 = arith.mulf %328, %327 : vector<8x16xf32>
    %330 = arith.addf %325, %329 : vector<8x16xf32>
    %331 = vector.extract_strided_slice %205 {offsets = [0, 23], sizes = [8, 1], strides = [1, 1]} : vector<8x32xf32> to vector<8x1xf32>
    %332 = vector.extract_strided_slice %212 {offsets = [0, 368], sizes = [8, 16], strides = [1, 1]} : vector<8x512xf32> to vector<8x16xf32>
    %333 = vector.broadcast %331 : vector<8x1xf32> to vector<8x16xf32>
    %334 = arith.mulf %333, %332 : vector<8x16xf32>
    %335 = arith.addf %330, %334 : vector<8x16xf32>
    %336 = vector.extract_strided_slice %205 {offsets = [0, 24], sizes = [8, 1], strides = [1, 1]} : vector<8x32xf32> to vector<8x1xf32>
    %337 = vector.extract_strided_slice %212 {offsets = [0, 384], sizes = [8, 16], strides = [1, 1]} : vector<8x512xf32> to vector<8x16xf32>
    %338 = vector.broadcast %336 : vector<8x1xf32> to vector<8x16xf32>
    %339 = arith.mulf %338, %337 : vector<8x16xf32>
    %340 = arith.addf %335, %339 : vector<8x16xf32>
    %341 = vector.extract_strided_slice %205 {offsets = [0, 25], sizes = [8, 1], strides = [1, 1]} : vector<8x32xf32> to vector<8x1xf32>
    %342 = vector.extract_strided_slice %212 {offsets = [0, 400], sizes = [8, 16], strides = [1, 1]} : vector<8x512xf32> to vector<8x16xf32>
    %343 = vector.broadcast %341 : vector<8x1xf32> to vector<8x16xf32>
    %344 = arith.mulf %343, %342 : vector<8x16xf32>
    %345 = arith.addf %340, %344 : vector<8x16xf32>
    %346 = vector.extract_strided_slice %205 {offsets = [0, 26], sizes = [8, 1], strides = [1, 1]} : vector<8x32xf32> to vector<8x1xf32>
    %347 = vector.extract_strided_slice %212 {offsets = [0, 416], sizes = [8, 16], strides = [1, 1]} : vector<8x512xf32> to vector<8x16xf32>
    %348 = vector.broadcast %346 : vector<8x1xf32> to vector<8x16xf32>
    %349 = arith.mulf %348, %347 : vector<8x16xf32>
    %350 = arith.addf %345, %349 : vector<8x16xf32>
    %351 = vector.extract_strided_slice %205 {offsets = [0, 27], sizes = [8, 1], strides = [1, 1]} : vector<8x32xf32> to vector<8x1xf32>
    %352 = vector.extract_strided_slice %212 {offsets = [0, 432], sizes = [8, 16], strides = [1, 1]} : vector<8x512xf32> to vector<8x16xf32>
    %353 = vector.broadcast %351 : vector<8x1xf32> to vector<8x16xf32>
    %354 = arith.mulf %353, %352 : vector<8x16xf32>
    %355 = arith.addf %350, %354 : vector<8x16xf32>
    %356 = vector.extract_strided_slice %205 {offsets = [0, 28], sizes = [8, 1], strides = [1, 1]} : vector<8x32xf32> to vector<8x1xf32>
    %357 = vector.extract_strided_slice %212 {offsets = [0, 448], sizes = [8, 16], strides = [1, 1]} : vector<8x512xf32> to vector<8x16xf32>
    %358 = vector.broadcast %356 : vector<8x1xf32> to vector<8x16xf32>
    %359 = arith.mulf %358, %357 : vector<8x16xf32>
    %360 = arith.addf %355, %359 : vector<8x16xf32>
    %361 = vector.extract_strided_slice %205 {offsets = [0, 29], sizes = [8, 1], strides = [1, 1]} : vector<8x32xf32> to vector<8x1xf32>
    %362 = vector.extract_strided_slice %212 {offsets = [0, 464], sizes = [8, 16], strides = [1, 1]} : vector<8x512xf32> to vector<8x16xf32>
    %363 = vector.broadcast %361 : vector<8x1xf32> to vector<8x16xf32>
    %364 = arith.mulf %363, %362 : vector<8x16xf32>
    %365 = arith.addf %360, %364 : vector<8x16xf32>
    %366 = vector.extract_strided_slice %205 {offsets = [0, 30], sizes = [8, 1], strides = [1, 1]} : vector<8x32xf32> to vector<8x1xf32>
    %367 = vector.extract_strided_slice %212 {offsets = [0, 480], sizes = [8, 16], strides = [1, 1]} : vector<8x512xf32> to vector<8x16xf32>
    %368 = vector.broadcast %366 : vector<8x1xf32> to vector<8x16xf32>
    %369 = arith.mulf %368, %367 : vector<8x16xf32>
    %370 = arith.addf %365, %369 : vector<8x16xf32>
    %371 = vector.extract_strided_slice %205 {offsets = [0, 31], sizes = [8, 1], strides = [1, 1]} : vector<8x32xf32> to vector<8x1xf32>
    %372 = vector.extract_strided_slice %212 {offsets = [0, 496], sizes = [8, 16], strides = [1, 1]} : vector<8x512xf32> to vector<8x16xf32>
    %373 = vector.broadcast %371 : vector<8x1xf32> to vector<8x16xf32>
    %374 = arith.mulf %373, %372 : vector<8x16xf32>
    %375 = arith.addf %370, %374 : vector<8x16xf32>
    %376 = math.tanh %375 : vector<8x16xf32>
    %c0_42 = arith.constant 0 : index
    %c0_43 = arith.constant 0 : index
    %377 = vector.load %arg19[%c0_42, %c0_43] : memref<32x16xf32, #tpu.memory_space<vmem>>, vector<32x16xf32>
    %c0_44 = arith.constant 0 : index
    %c0_45 = arith.constant 0 : index
    %378 = vector.load %arg20[%c0_44, %c0_45] : memref<1x16xf32, #tpu.memory_space<vmem>>, vector<1x16xf32>
    %c0_46 = arith.constant 0 : index
    %c0_47 = arith.constant 0 : index
    %379 = vector.load %arg21[%c0_46, %c0_47] : memref<32x1xf32, #tpu.memory_space<vmem>>, vector<32x1xf32>
    %c0_48 = arith.constant 0 : index
    %c0_49 = arith.constant 0 : index
    %380 = vector.load %arg22[%c0_48, %c0_49] : memref<1x1xf32, #tpu.memory_space<vmem>>, vector<1x1xf32>
    %cst_50 = arith.constant dense<0.000000e+00> : vector<8x16xf32>
    %381 = tpu.matmul %12, %377, %cst_50 {dimension_numbers = #tpu.dot_dimension_numbers<[1], [0], [0], [1], [0, 0, 1, 1], [], []>} : vector<8x32xf32>, vector<32x16xf32>, vector<8x16xf32> -> vector<8x16xf32>
    %382 = vector.broadcast %378 : vector<1x16xf32> to vector<8x16xf32>
    %383 = arith.addf %381, %382 : vector<8x16xf32>
    %cst_51 = arith.constant dense<0.000000e+00> : vector<8x1xf32>
    %384 = tpu.matmul %12, %379, %cst_51 {dimension_numbers = #tpu.dot_dimension_numbers<[1], [0], [0], [1], [0, 0, 1, 1], [], []>} : vector<8x32xf32>, vector<32x1xf32>, vector<8x1xf32> -> vector<8x1xf32>
    %385 = vector.broadcast %380 : vector<1x1xf32> to vector<8x1xf32>
    %386 = arith.addf %384, %385 : vector<8x1xf32>
    %387 = vector.extract_strided_slice %376 {offsets = [0, 0], sizes = [8, 1], strides = [1, 1]} : vector<8x16xf32> to vector<8x1xf32>
    %388 = vector.extract_strided_slice %383 {offsets = [0, 0], sizes = [8, 1], strides = [1, 1]} : vector<8x16xf32> to vector<8x1xf32>
    %389 = arith.mulf %387, %388 : vector<8x1xf32>
    %390 = arith.addf %386, %389 : vector<8x1xf32>
    %391 = vector.extract_strided_slice %376 {offsets = [0, 1], sizes = [8, 1], strides = [1, 1]} : vector<8x16xf32> to vector<8x1xf32>
    %392 = vector.extract_strided_slice %383 {offsets = [0, 1], sizes = [8, 1], strides = [1, 1]} : vector<8x16xf32> to vector<8x1xf32>
    %393 = arith.mulf %391, %392 : vector<8x1xf32>
    %394 = arith.addf %390, %393 : vector<8x1xf32>
    %395 = vector.extract_strided_slice %376 {offsets = [0, 2], sizes = [8, 1], strides = [1, 1]} : vector<8x16xf32> to vector<8x1xf32>
    %396 = vector.extract_strided_slice %383 {offsets = [0, 2], sizes = [8, 1], strides = [1, 1]} : vector<8x16xf32> to vector<8x1xf32>
    %397 = arith.mulf %395, %396 : vector<8x1xf32>
    %398 = arith.addf %394, %397 : vector<8x1xf32>
    %399 = vector.extract_strided_slice %376 {offsets = [0, 3], sizes = [8, 1], strides = [1, 1]} : vector<8x16xf32> to vector<8x1xf32>
    %400 = vector.extract_strided_slice %383 {offsets = [0, 3], sizes = [8, 1], strides = [1, 1]} : vector<8x16xf32> to vector<8x1xf32>
    %401 = arith.mulf %399, %400 : vector<8x1xf32>
    %402 = arith.addf %398, %401 : vector<8x1xf32>
    %403 = vector.extract_strided_slice %376 {offsets = [0, 4], sizes = [8, 1], strides = [1, 1]} : vector<8x16xf32> to vector<8x1xf32>
    %404 = vector.extract_strided_slice %383 {offsets = [0, 4], sizes = [8, 1], strides = [1, 1]} : vector<8x16xf32> to vector<8x1xf32>
    %405 = arith.mulf %403, %404 : vector<8x1xf32>
    %406 = arith.addf %402, %405 : vector<8x1xf32>
    %407 = vector.extract_strided_slice %376 {offsets = [0, 5], sizes = [8, 1], strides = [1, 1]} : vector<8x16xf32> to vector<8x1xf32>
    %408 = vector.extract_strided_slice %383 {offsets = [0, 5], sizes = [8, 1], strides = [1, 1]} : vector<8x16xf32> to vector<8x1xf32>
    %409 = arith.mulf %407, %408 : vector<8x1xf32>
    %410 = arith.addf %406, %409 : vector<8x1xf32>
    %411 = vector.extract_strided_slice %376 {offsets = [0, 6], sizes = [8, 1], strides = [1, 1]} : vector<8x16xf32> to vector<8x1xf32>
    %412 = vector.extract_strided_slice %383 {offsets = [0, 6], sizes = [8, 1], strides = [1, 1]} : vector<8x16xf32> to vector<8x1xf32>
    %413 = arith.mulf %411, %412 : vector<8x1xf32>
    %414 = arith.addf %410, %413 : vector<8x1xf32>
    %415 = vector.extract_strided_slice %376 {offsets = [0, 7], sizes = [8, 1], strides = [1, 1]} : vector<8x16xf32> to vector<8x1xf32>
    %416 = vector.extract_strided_slice %383 {offsets = [0, 7], sizes = [8, 1], strides = [1, 1]} : vector<8x16xf32> to vector<8x1xf32>
    %417 = arith.mulf %415, %416 : vector<8x1xf32>
    %418 = arith.addf %414, %417 : vector<8x1xf32>
    %419 = vector.extract_strided_slice %376 {offsets = [0, 8], sizes = [8, 1], strides = [1, 1]} : vector<8x16xf32> to vector<8x1xf32>
    %420 = vector.extract_strided_slice %383 {offsets = [0, 8], sizes = [8, 1], strides = [1, 1]} : vector<8x16xf32> to vector<8x1xf32>
    %421 = arith.mulf %419, %420 : vector<8x1xf32>
    %422 = arith.addf %418, %421 : vector<8x1xf32>
    %423 = vector.extract_strided_slice %376 {offsets = [0, 9], sizes = [8, 1], strides = [1, 1]} : vector<8x16xf32> to vector<8x1xf32>
    %424 = vector.extract_strided_slice %383 {offsets = [0, 9], sizes = [8, 1], strides = [1, 1]} : vector<8x16xf32> to vector<8x1xf32>
    %425 = arith.mulf %423, %424 : vector<8x1xf32>
    %426 = arith.addf %422, %425 : vector<8x1xf32>
    %427 = vector.extract_strided_slice %376 {offsets = [0, 10], sizes = [8, 1], strides = [1, 1]} : vector<8x16xf32> to vector<8x1xf32>
    %428 = vector.extract_strided_slice %383 {offsets = [0, 10], sizes = [8, 1], strides = [1, 1]} : vector<8x16xf32> to vector<8x1xf32>
    %429 = arith.mulf %427, %428 : vector<8x1xf32>
    %430 = arith.addf %426, %429 : vector<8x1xf32>
    %431 = vector.extract_strided_slice %376 {offsets = [0, 11], sizes = [8, 1], strides = [1, 1]} : vector<8x16xf32> to vector<8x1xf32>
    %432 = vector.extract_strided_slice %383 {offsets = [0, 11], sizes = [8, 1], strides = [1, 1]} : vector<8x16xf32> to vector<8x1xf32>
    %433 = arith.mulf %431, %432 : vector<8x1xf32>
    %434 = arith.addf %430, %433 : vector<8x1xf32>
    %435 = vector.extract_strided_slice %376 {offsets = [0, 12], sizes = [8, 1], strides = [1, 1]} : vector<8x16xf32> to vector<8x1xf32>
    %436 = vector.extract_strided_slice %383 {offsets = [0, 12], sizes = [8, 1], strides = [1, 1]} : vector<8x16xf32> to vector<8x1xf32>
    %437 = arith.mulf %435, %436 : vector<8x1xf32>
    %438 = arith.addf %434, %437 : vector<8x1xf32>
    %439 = vector.extract_strided_slice %376 {offsets = [0, 13], sizes = [8, 1], strides = [1, 1]} : vector<8x16xf32> to vector<8x1xf32>
    %440 = vector.extract_strided_slice %383 {offsets = [0, 13], sizes = [8, 1], strides = [1, 1]} : vector<8x16xf32> to vector<8x1xf32>
    %441 = arith.mulf %439, %440 : vector<8x1xf32>
    %442 = arith.addf %438, %441 : vector<8x1xf32>
    %443 = vector.extract_strided_slice %376 {offsets = [0, 14], sizes = [8, 1], strides = [1, 1]} : vector<8x16xf32> to vector<8x1xf32>
    %444 = vector.extract_strided_slice %383 {offsets = [0, 14], sizes = [8, 1], strides = [1, 1]} : vector<8x16xf32> to vector<8x1xf32>
    %445 = arith.mulf %443, %444 : vector<8x1xf32>
    %446 = arith.addf %442, %445 : vector<8x1xf32>
    %447 = vector.extract_strided_slice %376 {offsets = [0, 15], sizes = [8, 1], strides = [1, 1]} : vector<8x16xf32> to vector<8x1xf32>
    %448 = vector.extract_strided_slice %383 {offsets = [0, 15], sizes = [8, 1], strides = [1, 1]} : vector<8x16xf32> to vector<8x1xf32>
    %449 = arith.mulf %447, %448 : vector<8x1xf32>
    %450 = arith.addf %446, %449 : vector<8x1xf32>
    %c0_52 = arith.constant 0 : index
    %c0_53 = arith.constant 0 : index
    %451 = vector.load %arg23[%c0_52, %c0_53] : memref<8x1xf32, #tpu.memory_space<vmem>>, vector<8x1xf32>
    tpu.vector_store %arg23[%c0_52, %c0_53], %450 {strides = array<i32>} : memref<8x1xf32, #tpu.memory_space<vmem>>, vector<8x1xf32>,
    return
  }
  func.func @transform_0(%arg0: i32) -> (i32, i32) {
    %c0_i32 = arith.constant 0 : i32
    %c0_i32_0 = arith.constant 0 : i32
    return %arg0, %c0_i32 : i32, i32
  }
  func.func @transform_1(%arg0: i32) -> (i32, i32) {
    %c0_i32 = arith.constant 0 : i32
    %c0_i32_0 = arith.constant 0 : i32
    return %arg0, %c0_i32 : i32, i32
  }
  func.func @transform_2(%arg0: i32) -> (i32, i32) {
    %c0_i32 = arith.constant 0 : i32
    %c0_i32_0 = arith.constant 0 : i32
    %c0_i32_1 = arith.constant 0 : i32
    return %c0_i32, %c0_i32_0 : i32, i32
  }
  func.func @transform_3(%arg0: i32) -> (i32, i32) {
    %c0_i32 = arith.constant 0 : i32
    %c0_i32_0 = arith.constant 0 : i32
    %c0_i32_1 = arith.constant 0 : i32
    return %c0_i32, %c0_i32_0 : i32, i32
  }
  func.func @transform_4(%arg0: i32) -> (i32, i32) {
    %c0_i32 = arith.constant 0 : i32
    %c0_i32_0 = arith.constant 0 : i32
    %c0_i32_1 = arith.constant 0 : i32
    return %c0_i32, %c0_i32_0 : i32, i32
  }
  func.func @transform_5(%arg0: i32) -> (i32, i32) {
    %c0_i32 = arith.constant 0 : i32
    %c0_i32_0 = arith.constant 0 : i32
    %c0_i32_1 = arith.constant 0 : i32
    return %c0_i32, %c0_i32_0 : i32, i32
  }
  func.func @transform_6(%arg0: i32) -> (i32, i32) {
    %c0_i32 = arith.constant 0 : i32
    %c0_i32_0 = arith.constant 0 : i32
    %c0_i32_1 = arith.constant 0 : i32
    return %c0_i32, %c0_i32_0 : i32, i32
  }
  func.func @transform_7(%arg0: i32) -> (i32, i32) {
    %c0_i32 = arith.constant 0 : i32
    %c0_i32_0 = arith.constant 0 : i32
    %c0_i32_1 = arith.constant 0 : i32
    return %c0_i32, %c0_i32_0 : i32, i32
  }
  func.func @transform_8(%arg0: i32) -> (i32, i32) {
    %c0_i32 = arith.constant 0 : i32
    %c0_i32_0 = arith.constant 0 : i32
    %c0_i32_1 = arith.constant 0 : i32
    return %c0_i32, %c0_i32_0 : i32, i32
  }
  func.func @transform_9(%arg0: i32) -> (i32, i32) {
    %c0_i32 = arith.constant 0 : i32
    %c0_i32_0 = arith.constant 0 : i32
    %c0_i32_1 = arith.constant 0 : i32
    return %c0_i32, %c0_i32_0 : i32, i32
  }
  func.func @transform_10(%arg0: i32) -> (i32, i32) {
    %c0_i32 = arith.constant 0 : i32
    %c0_i32_0 = arith.constant 0 : i32
    %c0_i32_1 = arith.constant 0 : i32
    return %c0_i32, %c0_i32_0 : i32, i32
  }
  func.func @transform_11(%arg0: i32) -> (i32, i32) {
    %c0_i32 = arith.constant 0 : i32
    %c0_i32_0 = arith.constant 0 : i32
    %c0_i32_1 = arith.constant 0 : i32
    return %c0_i32, %c0_i32_0 : i32, i32
  }
  func.func @transform_12(%arg0: i32) -> (i32, i32) {
    %c0_i32 = arith.constant 0 : i32
    %c0_i32_0 = arith.constant 0 : i32
    %c0_i32_1 = arith.constant 0 : i32
    return %c0_i32, %c0_i32_0 : i32, i32
  }
  func.func @transform_13(%arg0: i32) -> (i32, i32) {
    %c0_i32 = arith.constant 0 : i32
    %c0_i32_0 = arith.constant 0 : i32
    %c0_i32_1 = arith.constant 0 : i32
    return %c0_i32, %c0_i32_0 : i32, i32
  }
  func.func @transform_14(%arg0: i32) -> (i32, i32) {
    %c0_i32 = arith.constant 0 : i32
    %c0_i32_0 = arith.constant 0 : i32
    %c0_i32_1 = arith.constant 0 : i32
    return %c0_i32, %c0_i32_0 : i32, i32
  }
  func.func @transform_15(%arg0: i32) -> (i32, i32) {
    %c0_i32 = arith.constant 0 : i32
    %c0_i32_0 = arith.constant 0 : i32
    %c0_i32_1 = arith.constant 0 : i32
    return %c0_i32, %c0_i32_0 : i32, i32
  }
  func.func @transform_16(%arg0: i32) -> (i32, i32) {
    %c0_i32 = arith.constant 0 : i32
    %c0_i32_0 = arith.constant 0 : i32
    %c0_i32_1 = arith.constant 0 : i32
    return %c0_i32, %c0_i32_0 : i32, i32
  }
  func.func @transform_17(%arg0: i32) -> (i32, i32) {
    %c0_i32 = arith.constant 0 : i32
    %c0_i32_0 = arith.constant 0 : i32
    %c0_i32_1 = arith.constant 0 : i32
    return %c0_i32, %c0_i32_0 : i32, i32
  }
  func.func @transform_18(%arg0: i32) -> (i32, i32) {
    %c0_i32 = arith.constant 0 : i32
    %c0_i32_0 = arith.constant 0 : i32
    %c0_i32_1 = arith.constant 0 : i32
    return %c0_i32, %c0_i32_0 : i32, i32
  }
  func.func @transform_19(%arg0: i32) -> (i32, i32) {
    %c0_i32 = arith.constant 0 : i32
    %c0_i32_0 = arith.constant 0 : i32
    %c0_i32_1 = arith.constant 0 : i32
    return %c0_i32, %c0_i32_0 : i32, i32
  }
  func.func @transform_20(%arg0: i32) -> (i32, i32) {
    %c0_i32 = arith.constant 0 : i32
    %c0_i32_0 = arith.constant 0 : i32
    %c0_i32_1 = arith.constant 0 : i32
    return %c0_i32, %c0_i32_0 : i32, i32
  }
  func.func @transform_21(%arg0: i32) -> (i32, i32) {
    %c0_i32 = arith.constant 0 : i32
    %c0_i32_0 = arith.constant 0 : i32
    %c0_i32_1 = arith.constant 0 : i32
    return %c0_i32, %c0_i32_0 : i32, i32
  }
  func.func @transform_22(%arg0: i32) -> (i32, i32) {
    %c0_i32 = arith.constant 0 : i32
    %c0_i32_0 = arith.constant 0 : i32
    return %arg0, %c0_i32 : i32, i32
  }
}

</mosaic_0001>

<llo_original>
// kernel: tpu_custom_call.1
$region0: #{tpu_custom_call.1}
  #allocation0 [shape = 'u32[]', space=smem, size = 0x4, offset = 0x4, fixed_abs, tag = 'smem constant byte address 0x4 - core index']
  #allocation1 [shape = 'u32[144,128]{1,0:T(1,128)}', space=vmem, size = 0x12000, scoped, tag = 'internal scratch']
  #allocation2 [shape = 'f32[1,1]{1,0:T(1,128)S(1)}', space=vmem, size = 0x200, scoped, tag = 'scoped memory for tpu_custom_call.1']
  %s0 = inlined_call_operand.vmem [shape: f32[8,2], index: 0, kind: input, shape index: {}]
  %s1 = inlined_call_operand.hbm [shape: f32[8,16], index: 1, kind: input, shape index: {}]
  %s2 = inlined_call_operand.hbm [shape: f32[16,32], index: 2, kind: input, shape index: {}]
  %s3 = inlined_call_operand.vmem [shape: f32[1,32], index: 3, kind: input, shape index: {}]
  %s4 = inlined_call_operand.vmem [shape: f32[32,32], index: 4, kind: input, shape index: {}]
  %s5 = inlined_call_operand.vmem [shape: f32[1,32], index: 5, kind: input, shape index: {}]
  %s6 = inlined_call_operand.vmem [shape: f32[32,64], index: 6, kind: input, shape index: {}]
  %s7 = inlined_call_operand.hbm [shape: f32[1,64], index: 7, kind: input, shape index: {}]
  %s8 = inlined_call_operand.hbm [shape: f32[32,32], index: 8, kind: input, shape index: {}]
  %s9 = inlined_call_operand.hbm [shape: f32[1,32], index: 9, kind: input, shape index: {}]
  %s10 = inlined_call_operand.hbm [shape: f32[32,1024], index: 10, kind: input, shape index: {}]
  %s11 = inlined_call_operand.hbm [shape: f32[1,1024], index: 11, kind: input, shape index: {}]
  %s12 = inlined_call_operand.hbm [shape: f32[32,32], index: 12, kind: input, shape index: {}]
  %s13 = inlined_call_operand.hbm [shape: f32[1,32], index: 13, kind: input, shape index: {}]
  %s14 = inlined_call_operand.vmem [shape: f32[32,512], index: 14, kind: input, shape index: {}]
  %s15 = inlined_call_operand.hbm [shape: f32[1,512], index: 15, kind: input, shape index: {}]
  %s16 = inlined_call_operand.vmem [shape: f32[32,16], index: 16, kind: input, shape index: {}]
  %s17 = inlined_call_operand.hbm [shape: f32[1,16], index: 17, kind: input, shape index: {}]
  %s18 = inlined_call_operand.vmem [shape: f32[32,16], index: 18, kind: input, shape index: {}]
  %s19 = inlined_call_operand.vmem [shape: f32[1,16], index: 19, kind: input, shape index: {}]
  %s20 = inlined_call_operand.vmem [shape: f32[32,1], index: 20, kind: input, shape index: {}]
  %s21 = inlined_call_operand.<no memory space> [shape: f32[1,1], index: 21, kind: input, shape index: {}]
  %s22 = inlined_call_operand.vmem [shape: f32[8,1], index: 22, kind: output, shape index: {}]
  %s23 = sld [smem:[#allocation0]]
  $region142: #{tpu_custom_call.1} parent=0
    _
  %s25 = ssub.s32 1, %s23
  %s26 = scalar_select 0, %s25, %s23
  %v27 = vstv %s21
  %28 = vst [vmem:[#allocation2] sm:$0x1] %v27
  $region1: #{tpu_custom_call.1} parent=0
    #allocation3 [shape = 'u8[4096]{0}', space=vmem, size = 0x1000, scoped, tag = 'input window, operand 1, single buffered']
    #allocation4 [shape = 's32[1]{0}', space=sflag, size = 0x4, scoped, tag = 'scoped memory for tpu_custom_call.1']
    #allocation5 [shape = 'u8[8192]{0}', space=vmem, size = 0x2000, scoped, tag = 'input window, operand 2, single buffered']
    #allocation6 [shape = 's32[1]{0}', space=sflag, size = 0x4, scoped, tag = 'scoped memory for tpu_custom_call.1']
    #allocation7 [shape = 'u8[512]{0}', space=vmem, size = 0x400, scoped, tag = 'input window, operand 7, single buffered']
    #allocation8 [shape = 'u8[16384]{0}', space=vmem, size = 0x4000, scoped, tag = 'input window, operand 8, single buffered']
    #allocation9 [shape = 's32[1]{0}', space=sflag, size = 0x4, scoped, tag = 'scoped memory for tpu_custom_call.1']
    #allocation10 [shape = 'u8[512]{0}', space=vmem, size = 0x400, scoped, tag = 'input window, operand 9, single buffered']
    #allocation11 [shape = 'u8[131072]{0}', space=vmem, size = 0x20000, scoped, tag = 'input window, operand 10, single buffered']
    #allocation12 [shape = 's32[1]{0}', space=sflag, size = 0x4, scoped, tag = 'scoped memory for tpu_custom_call.1']
    #allocation13 [shape = 'u8[4096]{0}', space=vmem, size = 0x1000, scoped, tag = 'input window, operand 11, single buffered']
    #allocation14 [shape = 'u8[16384]{0}', space=vmem, size = 0x4000, scoped, tag = 'input window, operand 12, single buffered']
    #allocation15 [shape = 's32[1]{0}', space=sflag, size = 0x4, scoped, tag = 'scoped memory for tpu_custom_call.1']
    #allocation16 [shape = 'u8[512]{0}', space=vmem, size = 0x400, scoped, tag = 'input window, operand 13, single buffered']
    #allocation17 [shape = 'u8[2048]{0}', space=vmem, size = 0x800, scoped, tag = 'input window, operand 15, single buffered']
    #allocation18 [shape = 's32[1]{0}', space=sflag, size = 0x4, scoped, tag = 'scoped memory for tpu_custom_call.1']
    #allocation19 [shape = 'u8[512]{0}', space=vmem, size = 0x400, scoped, tag = 'input window, operand 17, single buffered']
    %29 = vsyncpa [#allocation4], 0
    %30 = vsyncpa [#allocation6], 0
    %31 = vsyncpa [#allocation9], 0
    %32 = vsyncpa [#allocation12], 0
    %33 = vsyncpa [#allocation15], 0
    %34 = vsyncpa [#allocation18], 0
    // Predicated region
    $region2: #{tpu_custom_call.1} parent=1 // pred_check
      _
    $region3: #{tpu_custom_call.1} parent=1 // pred_check_branch
      %36 = sbr.rel (0) target = $region5
    $region4: #{tpu_custom_call.1} parent=1 // pred_region
      _
    $region5: #{tpu_custom_call.1} parent=1 // pred_fallthru
      _
    // Predicated region
    $region6: #{tpu_custom_call.1} parent=1 // pred_check
      _
    $region7: #{tpu_custom_call.1} parent=1 // pred_check_branch
      %38 = sbr.rel (0) target = $region9
    $region8: #{tpu_custom_call.1} parent=1 // pred_region
      %s40 = ssub.s32 128, 128
      %41 = vsyncadd [#allocation4], %s40
      %s43 = sshll.u32 [#allocation3], 4
      %s44 = int_to_ptr.vmem [resolvable:$true] %s43
      %46 = dma.hbm_to_vmem [thread:$0]  %s1, 128, %s44, [#allocation4]
    $region9: #{tpu_custom_call.1} parent=1 // pred_fallthru
      _
    // Predicated region
    $region10: #{tpu_custom_call.1} parent=1 // pred_check
      _
    $region11: #{tpu_custom_call.1} parent=1 // pred_check_branch
      %48 = sbr.rel (0) target = $region13
    $region12: #{tpu_custom_call.1} parent=1 // pred_region
      %s50 = ssub.s32 256, 256
      %51 = vsyncadd [#allocation6], %s50
      %s52 = sshll.u32 [#allocation5], 4
      %s53 = int_to_ptr.vmem [resolvable:$true] %s52
      %58 = dma.hbm_to_vmem [thread:$0]  %s2, 256, %s53, [#allocation6], 128, 128, 8
    $region13: #{tpu_custom_call.1} parent=1 // pred_fallthru
      _
    // Predicated region
    $region14: #{tpu_custom_call.1} parent=1 // pred_check
      _
    $region15: #{tpu_custom_call.1} parent=1 // pred_check_branch
      %60 = sbr.rel (0) target = $region17
    $region16: #{tpu_custom_call.1} parent=1 // pred_region
      _
    $region17: #{tpu_custom_call.1} parent=1 // pred_fallthru
      _
    // Predicated region
    $region18: #{tpu_custom_call.1} parent=1 // pred_check
      _
    $region19: #{tpu_custom_call.1} parent=1 // pred_check_branch
      %62 = sbr.rel (0) target = $region21
    $region20: #{tpu_custom_call.1} parent=1 // pred_region
      _
    $region21: #{tpu_custom_call.1} parent=1 // pred_fallthru
      _
    // Predicated region
    $region22: #{tpu_custom_call.1} parent=1 // pred_check
      _
    $region23: #{tpu_custom_call.1} parent=1 // pred_check_branch
      %64 = sbr.rel (0) target = $region25
    $region24: #{tpu_custom_call.1} parent=1 // pred_region
      _
    $region25: #{tpu_custom_call.1} parent=1 // pred_fallthru
      _
    // Predicated region
    $region26: #{tpu_custom_call.1} parent=1 // pred_check
      _
    $region27: #{tpu_custom_call.1} parent=1 // pred_check_branch
      %66 = sbr.rel (0) target = $region29
    $region28: #{tpu_custom_call.1} parent=1 // pred_region
      _
    $region29: #{tpu_custom_call.1} parent=1 // pred_fallthru
      _
    // Predicated region
    $region30: #{tpu_custom_call.1} parent=1 // pred_check
      _
    $region31: #{tpu_custom_call.1} parent=1 // pred_check_branch
      %68 = sbr.rel (0) target = $region33
    $region32: #{tpu_custom_call.1} parent=1 // pred_region
      %s70 = ssub.s32 16, 16
      %71 = vsyncadd [#allocation6], %s70
      %s73 = sshll.u32 [#allocation7], 4
      %s74 = int_to_ptr.vmem [resolvable:$true] %s73
      %76 = dma.hbm_to_vmem [thread:$0]  %s7, 16, %s74, [#allocation6]
    $region33: #{tpu_custom_call.1} parent=1 // pred_fallthru
      _
    // Predicated region
    $region34: #{tpu_custom_call.1} parent=1 // pred_check
      _
    $region35: #{tpu_custom_call.1} parent=1 // pred_check_branch
      %78 = sbr.rel (0) target = $region37
    $region36: #{tpu_custom_call.1} parent=1 // pred_region
      %s80 = ssub.s32 512, 512
      %81 = vsyncadd [#allocation9], %s80
      %s82 = sshll.u32 [#allocation8], 4
      %s83 = int_to_ptr.vmem [resolvable:$true] %s82
      %88 = dma.hbm_to_vmem [thread:$0]  %s8, 512, %s83, [#allocation9], 128, 128, 8
    $region37: #{tpu_custom_call.1} parent=1 // pred_fallthru
      _
    // Predicated region
    $region38: #{tpu_custom_call.1} parent=1 // pred_check
      _
    $region39: #{tpu_custom_call.1} parent=1 // pred_check_branch
      %90 = sbr.rel (0) target = $region41
    $region40: #{tpu_custom_call.1} parent=1 // pred_region
      %s92 = ssub.s32 16, 16
      %93 = vsyncadd [#allocation9], %s92
      %s95 = sshll.u32 [#allocation10], 4
      %s96 = int_to_ptr.vmem [resolvable:$true] %s95
      %98 = dma.hbm_to_vmem [thread:$0]  %s9, 16, %s96, [#allocation9]
    $region41: #{tpu_custom_call.1} parent=1 // pred_fallthru
      _
    // Predicated region
    $region42: #{tpu_custom_call.1} parent=1 // pred_check
      _
    $region43: #{tpu_custom_call.1} parent=1 // pred_check_branch
      %100 = sbr.rel (0) target = $region45
    $region44: #{tpu_custom_call.1} parent=1 // pred_region
      %s102 = ssub.s32 4096, 4096
      %103 = vsyncadd [#allocation12], %s102
      %s104 = sshll.u32 [#allocation11], 4
      %s105 = int_to_ptr.vmem [resolvable:$true] %s104
      %110 = dma.hbm_to_vmem [thread:$0]  %s10, 4096, %s105, [#allocation12], 1024, 1024, 64
    $region45: #{tpu_custom_call.1} parent=1 // pred_fallthru
      _
    // Predicated region
    $region46: #{tpu_custom_call.1} parent=1 // pred_check
      _
    $region47: #{tpu_custom_call.1} parent=1 // pred_check_branch
      %112 = sbr.rel (0) target = $region49
    $region48: #{tpu_custom_call.1} parent=1 // pred_region
      %s114 = ssub.s32 128, 128
      %115 = vsyncadd [#allocation12], %s114
      %s117 = sshll.u32 [#allocation13], 4
      %s118 = int_to_ptr.vmem [resolvable:$true] %s117
      %120 = dma.hbm_to_vmem [thread:$0]  %s11, 128, %s118, [#allocation12]
    $region49: #{tpu_custom_call.1} parent=1 // pred_fallthru
      _
    // Predicated region
    $region50: #{tpu_custom_call.1} parent=1 // pred_check
      _
    $region51: #{tpu_custom_call.1} parent=1 // pred_check_branch
      %122 = sbr.rel (0) target = $region53
    $region52: #{tpu_custom_call.1} parent=1 // pred_region
      %s124 = ssub.s32 512, 512
      %125 = vsyncadd [#allocation15], %s124
      %s126 = sshll.u32 [#allocation14], 4
      %s127 = int_to_ptr.vmem [resolvable:$true] %s126
      %132 = dma.hbm_to_vmem [thread:$0]  %s12, 512, %s127, [#allocation15], 128, 128, 8
    $region53: #{tpu_custom_call.1} parent=1 // pred_fallthru
      _
    // Predicated region
    $region54: #{tpu_custom_call.1} parent=1 // pred_check
      _
    $region55: #{tpu_custom_call.1} parent=1 // pred_check_branch
      %134 = sbr.rel (0) target = $region57
    $region56: #{tpu_custom_call.1} parent=1 // pred_region
      %s136 = ssub.s32 16, 16
      %137 = vsyncadd [#allocation15], %s136
      %s139 = sshll.u32 [#allocation16], 4
      %s140 = int_to_ptr.vmem [resolvable:$true] %s139
      %142 = dma.hbm_to_vmem [thread:$0]  %s13, 16, %s140, [#allocation15]
    $region57: #{tpu_custom_call.1} parent=1 // pred_fallthru
      _
    // Predicated region
    $region58: #{tpu_custom_call.1} parent=1 // pred_check
      _
    $region59: #{tpu_custom_call.1} parent=1 // pred_check_branch
      %144 = sbr.rel (0) target = $region61
    $region60: #{tpu_custom_call.1} parent=1 // pred_region
      _
    $region61: #{tpu_custom_call.1} parent=1 // pred_fallthru
      _
    // Predicated region
    $region62: #{tpu_custom_call.1} parent=1 // pred_check
      _
    $region63: #{tpu_custom_call.1} parent=1 // pred_check_branch
      %146 = sbr.rel (0) target = $region65
    $region64: #{tpu_custom_call.1} parent=1 // pred_region
      %s148 = ssub.s32 64, 64
      %149 = vsyncadd [#allocation18], %s148
      %s151 = sshll.u32 [#allocation17], 4
      %s152 = int_to_ptr.vmem [resolvable:$true] %s151
      %154 = dma.hbm_to_vmem [thread:$0]  %s15, 64, %s152, [#allocation18]
    $region65: #{tpu_custom_call.1} parent=1 // pred_fallthru
      _
    // Predicated region
    $region66: #{tpu_custom_call.1} parent=1 // pred_check
      _
    $region67: #{tpu_custom_call.1} parent=1 // pred_check_branch
      %156 = sbr.rel (0) target = $region69
    $region68: #{tpu_custom_call.1} parent=1 // pred_region
      _
    $region69: #{tpu_custom_call.1} parent=1 // pred_fallthru
      _
    // Predicated region
    $region70: #{tpu_custom_call.1} parent=1 // pred_check
      _
    $region71: #{tpu_custom_call.1} parent=1 // pred_check_branch
      %158 = sbr.rel (0) target = $region73
    $region72: #{tpu_custom_call.1} parent=1 // pred_region
      %s160 = ssub.s32 16, 16
      %161 = vsyncadd [#allocation18], %s160
      %s163 = sshll.u32 [#allocation19], 4
      %s164 = int_to_ptr.vmem [resolvable:$true] %s163
      %166 = dma.hbm_to_vmem [thread:$0]  %s17, 16, %s164, [#allocation18]
    $region73: #{tpu_custom_call.1} parent=1 // pred_fallthru
      _
    // Predicated region
    $region74: #{tpu_custom_call.1} parent=1 // pred_check
      _
    $region75: #{tpu_custom_call.1} parent=1 // pred_check_branch
      %168 = sbr.rel (0) target = $region77
    $region76: #{tpu_custom_call.1} parent=1 // pred_region
      _
    $region77: #{tpu_custom_call.1} parent=1 // pred_fallthru
      _
    // Predicated region
    $region78: #{tpu_custom_call.1} parent=1 // pred_check
      _
    $region79: #{tpu_custom_call.1} parent=1 // pred_check_branch
      %170 = sbr.rel (0) target = $region81
    $region80: #{tpu_custom_call.1} parent=1 // pred_region
      _
    $region81: #{tpu_custom_call.1} parent=1 // pred_fallthru
      _
    // Predicated region
    $region82: #{tpu_custom_call.1} parent=1 // pred_check
      _
    $region83: #{tpu_custom_call.1} parent=1 // pred_check_branch
      %172 = sbr.rel (0) target = $region85
    $region84: #{tpu_custom_call.1} parent=1 // pred_region
      _
    $region85: #{tpu_custom_call.1} parent=1 // pred_fallthru
      _
    // Predicated region
    $region86: #{tpu_custom_call.1} parent=1 // pred_check
      _
    $region87: #{tpu_custom_call.1} parent=1 // pred_check_branch
      %174 = sbr.rel (0) target = $region89
    $region88: #{tpu_custom_call.1} parent=1 // pred_region
      _
    $region89: #{tpu_custom_call.1} parent=1 // pred_fallthru
      _
    // Predicated region
    $region90: #{tpu_custom_call.1} parent=1 // pred_check
      _
    $region91: #{tpu_custom_call.1} parent=1 // pred_check_branch
      %176 = sbr.rel (0) target = $region93
    $region92: #{tpu_custom_call.1} parent=1 // pred_region
      %177 = dma.done [#allocation4], 128
    $region93: #{tpu_custom_call.1} parent=1 // pred_fallthru
      _
    // Predicated region
    $region94: #{tpu_custom_call.1} parent=1 // pred_check
      _
    $region95: #{tpu_custom_call.1} parent=1 // pred_check_branch
      %179 = sbr.rel (0) target = $region97
    $region96: #{tpu_custom_call.1} parent=1 // pred_region
      %180 = dma.done [#allocation6], 256
    $region97: #{tpu_custom_call.1} parent=1 // pred_fallthru
      _
    // Predicated region
    $region98: #{tpu_custom_call.1} parent=1 // pred_check
      _
    $region99: #{tpu_custom_call.1} parent=1 // pred_check_branch
      %182 = sbr.rel (0) target = $region101
    $region100: #{tpu_custom_call.1} parent=1 // pred_region
      %183 = dma.done [#allocation6], 16
    $region101: #{tpu_custom_call.1} parent=1 // pred_fallthru
      _
    // Predicated region
    $region102: #{tpu_custom_call.1} parent=1 // pred_check
      _
    $region103: #{tpu_custom_call.1} parent=1 // pred_check_branch
      %185 = sbr.rel (0) target = $region105
    $region104: #{tpu_custom_call.1} parent=1 // pred_region
      %186 = dma.done [#allocation9], 512
    $region105: #{tpu_custom_call.1} parent=1 // pred_fallthru
      _
    // Predicated region
    $region106: #{tpu_custom_call.1} parent=1 // pred_check
      _
    $region107: #{tpu_custom_call.1} parent=1 // pred_check_branch
      %188 = sbr.rel (0) target = $region109
    $region108: #{tpu_custom_call.1} parent=1 // pred_region
      %189 = dma.done [#allocation9], 16
    $region109: #{tpu_custom_call.1} parent=1 // pred_fallthru
      _
    // Predicated region
    $region110: #{tpu_custom_call.1} parent=1 // pred_check
      _
    $region111: #{tpu_custom_call.1} parent=1 // pred_check_branch
      %191 = sbr.rel (0) target = $region113
    $region112: #{tpu_custom_call.1} parent=1 // pred_region
      %192 = dma.done [#allocation12], 4096
    $region113: #{tpu_custom_call.1} parent=1 // pred_fallthru
      _
    // Predicated region
    $region114: #{tpu_custom_call.1} parent=1 // pred_check
      _
    $region115: #{tpu_custom_call.1} parent=1 // pred_check_branch
      %194 = sbr.rel (0) target = $region117
    $region116: #{tpu_custom_call.1} parent=1 // pred_region
      %195 = dma.done [#allocation12], 128
    $region117: #{tpu_custom_call.1} parent=1 // pred_fallthru
      _
    // Predicated region
    $region118: #{tpu_custom_call.1} parent=1 // pred_check
      _
    $region119: #{tpu_custom_call.1} parent=1 // pred_check_branch
      %197 = sbr.rel (0) target = $region121
    $region120: #{tpu_custom_call.1} parent=1 // pred_region
      %198 = dma.done [#allocation15], 512
    $region121: #{tpu_custom_call.1} parent=1 // pred_fallthru
      _
    // Predicated region
    $region122: #{tpu_custom_call.1} parent=1 // pred_check
      _
    $region123: #{tpu_custom_call.1} parent=1 // pred_check_branch
      %200 = sbr.rel (0) target = $region125
    $region124: #{tpu_custom_call.1} parent=1 // pred_region
      %201 = dma.done [#allocation15], 16
    $region125: #{tpu_custom_call.1} parent=1 // pred_fallthru
      _
    // Predicated region
    $region126: #{tpu_custom_call.1} parent=1 // pred_check
      _
    $region127: #{tpu_custom_call.1} parent=1 // pred_check_branch
      %203 = sbr.rel (0) target = $region129
    $region128: #{tpu_custom_call.1} parent=1 // pred_region
      %204 = dma.done [#allocation18], 64
    $region129: #{tpu_custom_call.1} parent=1 // pred_fallthru
      _
    // Predicated region
    $region130: #{tpu_custom_call.1} parent=1 // pred_check
      _
    $region131: #{tpu_custom_call.1} parent=1 // pred_check_branch
      %206 = sbr.rel (0) target = $region133
    $region132: #{tpu_custom_call.1} parent=1 // pred_region
      %207 = dma.done [#allocation18], 16
    $region133: #{tpu_custom_call.1} parent=1 // pred_fallthru
      _
    %v208 = vld [vmem:[#allocation3] sm:$0xff]
    %v209 = vld [vmem:[#allocation5] sm:$0xff]
    %v210 = vld [vmem:[#allocation5 + $0x8] sm:$0xff]
    %v211 = vld [vmem:[%s3] sm:$0x1]
    %v213 = vlaneseq
    %v214 = vshrl.u32 %v213, 7
    %v215 = vsub.s32 0, %v214
    %v216 = vrot.slane %v211, %v215
    %vm218 = vcmask 130048
    %v220 = vsel %vm218, %v208, 0
    %222 = vmatprep.subr.mxu0 0.0
    %223 = vmatpush1.msra.mxu0 %v209
    %224 = vmatprep.subr.mxu0 0.0
    %225 = vmatpush1.msra.mxu0 %v210
    %226 = vmatprep.subr.mxu0 0.0
    %227 = vmatpush1.msra.mxu0 0.0
    %228 = vmatprep.subr.mxu0 0.0
    %229 = vmatpush1.msra.mxu0 0.0
    %230 = vmatprep.subr.mxu0 0.0
    %231 = vmatpush1.msra.mxu0 0.0
    %232 = vmatprep.subr.mxu0 0.0
    %233 = vmatpush1.msra.mxu0 0.0
    %234 = vmatprep.subr.mxu0 0.0
    %235 = vmatpush1.msra.mxu0 0.0
    %236 = vmatprep.subr.mxu0 0.0
    %237 = vmatpush1.msra.mxu0 0.0
    %238 = vmatprep.subr.mxu0 0.0
    %239 = vmatpush1.msra.mxu0 0.0
    %240 = vmatprep.subr.mxu0 0.0
    %241 = vmatpush1.msra.mxu0 0.0
    %242 = vmatprep.subr.mxu0 0.0
    %243 = vmatpush1.msra.mxu0 0.0
    %244 = vmatprep.subr.mxu0 0.0
    %245 = vmatpush1.msra.mxu0 0.0
    %246 = vmatprep.subr.mxu0 0.0
    %247 = vmatpush1.msra.mxu0 0.0
    %248 = vmatprep.subr.mxu0 0.0
    %249 = vmatpush1.msra.mxu0 0.0
    %250 = vmatprep.subr.mxu0 0.0
    %251 = vmatpush1.msra.mxu0 0.0
    %252 = vmatprep.subr.mxu0 0.0
    %253 = vmatpush1.msra.mxu0 0.0
    %254 = vmatprep.subr.mxu0 0.0
    %255 = vmatpush1.msra.mxu0 0.0
    %256 = vmatprep.subr.mxu0 0.0
    %257 = vmatpush1.msra.mxu0 0.0
    %258 = vmatprep.subr.mxu0 0.0
    %259 = vmatpush1.msra.mxu0 0.0
    %260 = vmatprep.subr.mxu0 0.0
    %261 = vmatpush1.msra.mxu0 0.0
    %262 = vmatprep.subr.mxu0 0.0
    %263 = vmatpush1.msra.mxu0 0.0
    %264 = vmatprep.subr.mxu0 0.0
    %265 = vmatpush1.msra.mxu0 0.0
    %266 = vmatprep.subr.mxu0 0.0
    %267 = vmatpush1.msra.mxu0 0.0
    %268 = vmatprep.subr.mxu0 0.0
    %269 = vmatpush1.msra.mxu0 0.0
    %270 = vmatprep.subr.mxu0 0.0
    %271 = vmatpush1.msra.mxu0 0.0
    %272 = vmatprep.subr.mxu0 0.0
    %273 = vmatpush1.msra.mxu0 0.0
    %274 = vmatprep.subr.mxu0 0.0
    %275 = vmatpush1.msra.mxu0 0.0
    %276 = vmatprep.subr.mxu0 0.0
    %277 = vmatpush1.msra.mxu0 0.0
    %278 = vmatprep.subr.mxu0 0.0
    %279 = vmatpush1.msra.mxu0 0.0
    %280 = vmatprep.subr.mxu0 0.0
    %281 = vmatpush1.msra.mxu0 0.0
    %282 = vmatprep.subr.mxu0 0.0
    %283 = vmatpush1.msra.mxu0 0.0
    %284 = vmatprep.subr.mxu0 0.0
    %285 = vmatpush1.msra.mxu0 0.0
    %286 = vmatprep.mubr.f32.mxu0 0.0
    %287 = vmatmul.mubr.f32.gmra.mrb[0].mxu0 %v220
    %v288 = vpop.f32.mrb[0].mxu0
    %v289 = vadd.f32 %v216, %v288
    %v290 = vpop.f32.mrb[0].mxu0
    %291 = vdwg.mxu0
    %v292 = vtanh.pop %v289
    %v293 = vld [vmem:[%s4] sm:$0xff]
    %v294 = vld [vmem:[%s4 + $0x8] sm:$0xff]
    %v295 = vld [vmem:[%s4 + $0x10] sm:$0xff]
    %v296 = vld [vmem:[%s4 + $0x18] sm:$0xff]
    %v297 = vld [vmem:[%s5] sm:$0x1]
    %v299 = vlaneseq
    %v300 = vshrl.u32 %v299, 7
    %v301 = vsub.s32 0, %v300
    %v302 = vrot.slane %v297, %v301
    %vm304 = vcmask 261120
    %v306 = vsel %vm304, %v292, 0
    %308 = vmatprep.subr.mxu0 0.0
    %309 = vmatpush1.msra.mxu0 %v293
    %310 = vmatprep.subr.mxu0 0.0
    %311 = vmatpush1.msra.mxu0 %v294
    %312 = vmatprep.subr.mxu0 0.0
    %313 = vmatpush1.msra.mxu0 %v295
    %314 = vmatprep.subr.mxu0 0.0
    %315 = vmatpush1.msra.mxu0 %v296
    %316 = vmatprep.subr.mxu0 0.0
    %317 = vmatpush1.msra.mxu0 0.0
    %318 = vmatprep.subr.mxu0 0.0
    %319 = vmatpush1.msra.mxu0 0.0
    %320 = vmatprep.subr.mxu0 0.0
    %321 = vmatpush1.msra.mxu0 0.0
    %322 = vmatprep.subr.mxu0 0.0
    %323 = vmatpush1.msra.mxu0 0.0
    %324 = vmatprep.subr.mxu0 0.0
    %325 = vmatpush1.msra.mxu0 0.0
    %326 = vmatprep.subr.mxu0 0.0
    %327 = vmatpush1.msra.mxu0 0.0
    %328 = vmatprep.subr.mxu0 0.0
    %329 = vmatpush1.msra.mxu0 0.0
    %330 = vmatprep.subr.mxu0 0.0
    %331 = vmatpush1.msra.mxu0 0.0
    %332 = vmatprep.subr.mxu0 0.0
    %333 = vmatpush1.msra.mxu0 0.0
    %334 = vmatprep.subr.mxu0 0.0
    %335 = vmatpush1.msra.mxu0 0.0
    %336 = vmatprep.subr.mxu0 0.0
    %337 = vmatpush1.msra.mxu0 0.0
    %338 = vmatprep.subr.mxu0 0.0
    %339 = vmatpush1.msra.mxu0 0.0
    %340 = vmatprep.subr.mxu0 0.0
    %341 = vmatpush1.msra.mxu0 0.0
    %342 = vmatprep.subr.mxu0 0.0
    %343 = vmatpush1.msra.mxu0 0.0
    %344 = vmatprep.subr.mxu0 0.0
    %345 = vmatpush1.msra.mxu0 0.0
    %346 = vmatprep.subr.mxu0 0.0
    %347 = vmatpush1.msra.mxu0 0.0
    %348 = vmatprep.subr.mxu0 0.0
    %349 = vmatpush1.msra.mxu0 0.0
    %350 = vmatprep.subr.mxu0 0.0
    %351 = vmatpush1.msra.mxu0 0.0
    %352 = vmatprep.subr.mxu0 0.0
    %353 = vmatpush1.msra.mxu0 0.0
    %354 = vmatprep.subr.mxu0 0.0
    %355 = vmatpush1.msra.mxu0 0.0
    %356 = vmatprep.subr.mxu0 0.0
    %357 = vmatpush1.msra.mxu0 0.0
    %358 = vmatprep.subr.mxu0 0.0
    %359 = vmatpush1.msra.mxu0 0.0
    %360 = vmatprep.subr.mxu0 0.0
    %361 = vmatpush1.msra.mxu0 0.0
    %362 = vmatprep.subr.mxu0 0.0
    %363 = vmatpush1.msra.mxu0 0.0
    %364 = vmatprep.subr.mxu0 0.0
    %365 = vmatpush1.msra.mxu0 0.0
    %366 = vmatprep.subr.mxu0 0.0
    %367 = vmatpush1.msra.mxu0 0.0
    %368 = vmatprep.subr.mxu0 0.0
    %369 = vmatpush1.msra.mxu0 0.0
    %370 = vmatprep.subr.mxu0 0.0
    %371 = vmatpush1.msra.mxu0 0.0
    %372 = vmatprep.mubr.f32.mxu0 0.0
    %373 = vmatmul.mubr.f32.gmra.mrb[0].mxu0 %v306
    %v374 = vpop.f32.mrb[0].mxu0
    %v375 = vadd.f32 %v302, %v374
    %v376 = vpop.f32.mrb[0].mxu0
    %377 = vdwg.mxu0
    %v378 = vtanh.pop %v375
    %v379 = vld [vmem:[%s0] sm:$0xff]
    %v380 = vld [vmem:[%s6] sm:$0xff]
    %v381 = vld [vmem:[%s6 + $0x8] sm:$0xff]
    %v382 = vld [vmem:[%s6 + $0x10] sm:$0xff]
    %v383 = vld [vmem:[%s6 + $0x18] sm:$0xff]
    %v384 = vld [vmem:[#allocation7] sm:$0x1]
    %v385 = vld [vmem:[#allocation8] sm:$0xff]
    %v386 = vld [vmem:[#allocation8 + $0x8] sm:$0xff]
    %v387 = vld [vmem:[#allocation8 + $0x10] sm:$0xff]
    %v388 = vld [vmem:[#allocation8 + $0x18] sm:$0xff]
    %v389 = vld [vmem:[#allocation10] sm:$0x1]
    %v391 = vlaneseq
    %v392 = vshrl.u32 %v391, 7
    %v393 = vsub.s32 0, %v392
    %v394 = vrot.slane %v384, %v393
    %v397 = vsel %vm304, %v378, 0
    %399 = vmatprep.subr.mxu0 0.0
    %400 = vmatpush1.msra.mxu0 %v380
    %401 = vmatprep.subr.mxu0 0.0
    %402 = vmatpush1.msra.mxu0 %v381
    %403 = vmatprep.subr.mxu0 0.0
    %404 = vmatpush1.msra.mxu0 %v382
    %405 = vmatprep.subr.mxu0 0.0
    %406 = vmatpush1.msra.mxu0 %v383
    %407 = vmatprep.subr.mxu0 0.0
    %408 = vmatpush1.msra.mxu0 0.0
    %409 = vmatprep.subr.mxu0 0.0
    %410 = vmatpush1.msra.mxu0 0.0
    %411 = vmatprep.subr.mxu0 0.0
    %412 = vmatpush1.msra.mxu0 0.0
    %413 = vmatprep.subr.mxu0 0.0
    %414 = vmatpush1.msra.mxu0 0.0
    %415 = vmatprep.subr.mxu0 0.0
    %416 = vmatpush1.msra.mxu0 0.0
    %417 = vmatprep.subr.mxu0 0.0
    %418 = vmatpush1.msra.mxu0 0.0
    %419 = vmatprep.subr.mxu0 0.0
    %420 = vmatpush1.msra.mxu0 0.0
    %421 = vmatprep.subr.mxu0 0.0
    %422 = vmatpush1.msra.mxu0 0.0
    %423 = vmatprep.subr.mxu0 0.0
    %424 = vmatpush1.msra.mxu0 0.0
    %425 = vmatprep.subr.mxu0 0.0
    %426 = vmatpush1.msra.mxu0 0.0
    %427 = vmatprep.subr.mxu0 0.0
    %428 = vmatpush1.msra.mxu0 0.0
    %429 = vmatprep.subr.mxu0 0.0
    %430 = vmatpush1.msra.mxu0 0.0
    %431 = vmatprep.subr.mxu0 0.0
    %432 = vmatpush1.msra.mxu0 0.0
    %433 = vmatprep.subr.mxu0 0.0
    %434 = vmatpush1.msra.mxu0 0.0
    %435 = vmatprep.subr.mxu0 0.0
    %436 = vmatpush1.msra.mxu0 0.0
    %437 = vmatprep.subr.mxu0 0.0
    %438 = vmatpush1.msra.mxu0 0.0
    %439 = vmatprep.subr.mxu0 0.0
    %440 = vmatpush1.msra.mxu0 0.0
    %441 = vmatprep.subr.mxu0 0.0
    %442 = vmatpush1.msra.mxu0 0.0
    %443 = vmatprep.subr.mxu0 0.0
    %444 = vmatpush1.msra.mxu0 0.0
    %445 = vmatprep.subr.mxu0 0.0
    %446 = vmatpush1.msra.mxu0 0.0
    %447 = vmatprep.subr.mxu0 0.0
    %448 = vmatpush1.msra.mxu0 0.0
    %449 = vmatprep.subr.mxu0 0.0
    %450 = vmatpush1.msra.mxu0 0.0
    %451 = vmatprep.subr.mxu0 0.0
    %452 = vmatpush1.msra.mxu0 0.0
    %453 = vmatprep.subr.mxu0 0.0
    %454 = vmatpush1.msra.mxu0 0.0
    %455 = vmatprep.subr.mxu0 0.0
    %456 = vmatpush1.msra.mxu0 0.0
    %457 = vmatprep.subr.mxu0 0.0
    %458 = vmatpush1.msra.mxu0 0.0
    %459 = vmatprep.subr.mxu0 0.0
    %460 = vmatpush1.msra.mxu0 0.0
    %461 = vmatprep.subr.mxu0 0.0
    %462 = vmatpush1.msra.mxu0 0.0
    %463 = vmatprep.mubr.f32.mxu0 0.0
    %464 = vmatmul.mubr.f32.gmra.mrb[0].mxu0 %v397
    %v465 = vpop.f32.mrb[0].mxu0
    %v466 = vadd.f32 %v394, %v465
    %v467 = vpop.f32.mrb[0].mxu0
    %468 = vdwg.mxu0
    %v470 = vlaneseq
    %v471 = vshrl.u32 %v470, 7
    %v472 = vsub.s32 0, %v471
    %v473 = vrot.slane %v389, %v472
    %475 = vmatprep.subr.mxu0 0.0
    %476 = vmatpush1.msra.mxu0 %v385
    %477 = vmatprep.subr.mxu0 0.0
    %478 = vmatpush1.msra.mxu0 %v386
    %479 = vmatprep.subr.mxu0 0.0
    %480 = vmatpush1.msra.mxu0 %v387
    %481 = vmatprep.subr.mxu0 0.0
    %482 = vmatpush1.msra.mxu0 %v388
    %483 = vmatprep.subr.mxu0 0.0
    %484 = vmatpush1.msra.mxu0 0.0
    %485 = vmatprep.subr.mxu0 0.0
    %486 = vmatpush1.msra.mxu0 0.0
    %487 = vmatprep.subr.mxu0 0.0
    %488 = vmatpush1.msra.mxu0 0.0
    %489 = vmatprep.subr.mxu0 0.0
    %490 = vmatpush1.msra.mxu0 0.0
    %491 = vmatprep.subr.mxu0 0.0
    %492 = vmatpush1.msra.mxu0 0.0
    %493 = vmatprep.subr.mxu0 0.0
    %494 = vmatpush1.msra.mxu0 0.0
    %495 = vmatprep.subr.mxu0 0.0
    %496 = vmatpush1.msra.mxu0 0.0
    %497 = vmatprep.subr.mxu0 0.0
    %498 = vmatpush1.msra.mxu0 0.0
    %499 = vmatprep.subr.mxu0 0.0
    %500 = vmatpush1.msra.mxu0 0.0
    %501 = vmatprep.subr.mxu0 0.0
    %502 = vmatpush1.msra.mxu0 0.0
    %503 = vmatprep.subr.mxu0 0.0
    %504 = vmatpush1.msra.mxu0 0.0
    %505 = vmatprep.subr.mxu0 0.0
    %506 = vmatpush1.msra.mxu0 0.0
    %507 = vmatprep.subr.mxu0 0.0
    %508 = vmatpush1.msra.mxu0 0.0
    %509 = vmatprep.subr.mxu0 0.0
    %510 = vmatpush1.msra.mxu0 0.0
    %511 = vmatprep.subr.mxu0 0.0
    %512 = vmatpush1.msra.mxu0 0.0
    %513 = vmatprep.subr.mxu0 0.0
    %514 = vmatpush1.msra.mxu0 0.0
    %515 = vmatprep.subr.mxu0 0.0
    %516 = vmatpush1.msra.mxu0 0.0
    %517 = vmatprep.subr.mxu0 0.0
    %518 = vmatpush1.msra.mxu0 0.0
    %519 = vmatprep.subr.mxu0 0.0
    %520 = vmatpush1.msra.mxu0 0.0
    %521 = vmatprep.subr.mxu0 0.0
    %522 = vmatpush1.msra.mxu0 0.0
    %523 = vmatprep.subr.mxu0 0.0
    %524 = vmatpush1.msra.mxu0 0.0
    %525 = vmatprep.subr.mxu0 0.0
    %526 = vmatpush1.msra.mxu0 0.0
    %527 = vmatprep.subr.mxu0 0.0
    %528 = vmatpush1.msra.mxu0 0.0
    %529 = vmatprep.subr.mxu0 0.0
    %530 = vmatpush1.msra.mxu0 0.0
    %531 = vmatprep.subr.mxu0 0.0
    %532 = vmatpush1.msra.mxu0 0.0
    %533 = vmatprep.subr.mxu0 0.0
    %534 = vmatpush1.msra.mxu0 0.0
    %535 = vmatprep.subr.mxu0 0.0
    %536 = vmatpush1.msra.mxu0 0.0
    %537 = vmatprep.subr.mxu0 0.0
    %538 = vmatpush1.msra.mxu0 0.0
    %539 = vmatprep.mubr.f32.mxu0 0.0
    %540 = vmatmul.mubr.f32.gmra.mrb[0].mxu0 %v397
    %v541 = vpop.f32.mrb[0].mxu0
    %v542 = vadd.f32 %v473, %v541
    %v543 = vpop.f32.mrb[0].mxu0
    %544 = vdwg.mxu0
    %546 = vset.pattern.permute.xlu0 0
    %547 = vperm.xlu0 %546, %v379
    %v548 = vpop.permute.xlu0 %547
    %v550 = vmul.f32 %v548, %v466
    %v551 = vadd.f32 %v542, %v550
    %552 = vset.pattern.permute.xlu0 1
    %553 = vperm.xlu0 %552, %v379
    %v554 = vpop.permute.xlu0 %553
    %v556 = vmul.f32 %v554, %v466
    %558 = vrot.lane.b32.xlu0 %v556, 96
    %v559 = vpop.permute.xlu0 %558
    %v561 = vadd.f32 %v551, %v559
    %v562 = vtanh.pop %v561
    %v563 = vld [vmem:[#allocation11] sm:$0xff]
    %v564 = vld [vmem:[#allocation11 + $0x8] sm:$0xff]
    %v565 = vld [vmem:[#allocation11 + $0x10] sm:$0xff]
    %v566 = vld [vmem:[#allocation11 + $0x18] sm:$0xff]
    %v567 = vld [vmem:[#allocation11 + $0x20] sm:$0xff]
    %v568 = vld [vmem:[#allocation11 + $0x28] sm:$0xff]
    %v569 = vld [vmem:[#allocation11 + $0x30] sm:$0xff]
    %v570 = vld [vmem:[#allocation11 + $0x38] sm:$0xff]
    %v571 = vld [vmem:[#allocation11 + $0x40] sm:$0xff]
    %v572 = vld [vmem:[#allocation11 + $0x48] sm:$0xff]
    %v573 = vld [vmem:[#allocation11 + $0x50] sm:$0xff]
    %v574 = vld [vmem:[#allocation11 + $0x58] sm:$0xff]
    %v575 = vld [vmem:[#allocation11 + $0x60] sm:$0xff]
    %v576 = vld [vmem:[#allocation11 + $0x68] sm:$0xff]
    %v577 = vld [vmem:[#allocation11 + $0x70] sm:$0xff]
    %v578 = vld [vmem:[#allocation11 + $0x78] sm:$0xff]
    %v579 = vld [vmem:[#allocation11 + $0x80] sm:$0xff]
    %v580 = vld [vmem:[#allocation11 + $0x88] sm:$0xff]
    %v581 = vld [vmem:[#allocation11 + $0x90] sm:$0xff]
    %v582 = vld [vmem:[#allocation11 + $0x98] sm:$0xff]
    %v583 = vld [vmem:[#allocation11 + $0xa0] sm:$0xff]
    %v584 = vld [vmem:[#allocation11 + $0xa8] sm:$0xff]
    %v585 = vld [vmem:[#allocation11 + $0xb0] sm:$0xff]
    %v586 = vld [vmem:[#allocation11 + $0xb8] sm:$0xff]
    %v587 = vld [vmem:[#allocation11 + $0xc0] sm:$0xff]
    %v588 = vld [vmem:[#allocation11 + $0xc8] sm:$0xff]
    %v589 = vld [vmem:[#allocation11 + $0xd0] sm:$0xff]
    %v590 = vld [vmem:[#allocation11 + $0xd8] sm:$0xff]
    %v591 = vld [vmem:[#allocation11 + $0xe0] sm:$0xff]
    %v592 = vld [vmem:[#allocation11 + $0xe8] sm:$0xff]
    %v593 = vld [vmem:[#allocation11 + $0xf0] sm:$0xff]
    %v594 = vld [vmem:[#allocation11 + $0xf8] sm:$0xff]
    %v595 = vld [vmem:[#allocation13] sm:$0xff]
    %v596 = vld [vmem:[#allocation14] sm:$0xff]
    %v597 = vld [vmem:[#allocation14 + $0x8] sm:$0xff]
    %v598 = vld [vmem:[#allocation14 + $0x10] sm:$0xff]
    %v599 = vld [vmem:[#allocation14 + $0x18] sm:$0xff]
    %v600 = vld [vmem:[#allocation16] sm:$0x1]
    %v602 = vlaneseq
    %v603 = vshrl.u32 %v602, 7
    %v604 = vsub.s32 0, %v603
    %v605 = vrot.slane %v595, %v604
    %v606 = vlaneseq
    %v607 = vshrl.u32 %v606, 7
    %v608 = vsub.s32 1, %v607
    %v609 = vrot.slane %v595, %v608
    %v610 = vlaneseq
    %v611 = vshrl.u32 %v610, 7
    %v612 = vsub.s32 2, %v611
    %v613 = vrot.slane %v595, %v612
    %v614 = vlaneseq
    %v615 = vshrl.u32 %v614, 7
    %v616 = vsub.s32 3, %v615
    %v617 = vrot.slane %v595, %v616
    %v618 = vlaneseq
    %v619 = vshrl.u32 %v618, 7
    %v620 = vsub.s32 4, %v619
    %v621 = vrot.slane %v595, %v620
    %v622 = vlaneseq
    %v623 = vshrl.u32 %v622, 7
    %v624 = vsub.s32 5, %v623
    %v625 = vrot.slane %v595, %v624
    %v626 = vlaneseq
    %v627 = vshrl.u32 %v626, 7
    %v628 = vsub.s32 6, %v627
    %v629 = vrot.slane %v595, %v628
    %v630 = vlaneseq
    %v631 = vshrl.u32 %v630, 7
    %v632 = vsub.s32 7, %v631
    %v633 = vrot.slane %v595, %v632
    %642 = vmatprep.subr.mxu0 %v564
    %643 = vmatpush1.msra.mxu0 %v563
    %644 = vmatprep.subr.mxu0 %v572
    %645 = vmatpush1.msra.mxu0 %v571
    %646 = vmatprep.subr.mxu0 %v580
    %647 = vmatpush1.msra.mxu0 %v579
    %648 = vmatprep.subr.mxu0 %v588
    %649 = vmatpush1.msra.mxu0 %v587
    %650 = vmatprep.subr.mxu0 0.0
    %651 = vmatpush1.msra.mxu0 0.0
    %652 = vmatprep.subr.mxu0 0.0
    %653 = vmatpush1.msra.mxu0 0.0
    %654 = vmatprep.subr.mxu0 0.0
    %655 = vmatpush1.msra.mxu0 0.0
    %656 = vmatprep.subr.mxu0 0.0
    %657 = vmatpush1.msra.mxu0 0.0
    %658 = vmatprep.subr.mxu0 0.0
    %659 = vmatpush1.msra.mxu0 0.0
    %660 = vmatprep.subr.mxu0 0.0
    %661 = vmatpush1.msra.mxu0 0.0
    %662 = vmatprep.subr.mxu0 0.0
    %663 = vmatpush1.msra.mxu0 0.0
    %664 = vmatprep.subr.mxu0 0.0
    %665 = vmatpush1.msra.mxu0 0.0
    %666 = vmatprep.subr.mxu0 0.0
    %667 = vmatpush1.msra.mxu0 0.0
    %668 = vmatprep.subr.mxu0 0.0
    %669 = vmatpush1.msra.mxu0 0.0
    %670 = vmatprep.subr.mxu0 0.0
    %671 = vmatpush1.msra.mxu0 0.0
    %672 = vmatprep.subr.mxu0 0.0
    %673 = vmatpush1.msra.mxu0 0.0
    %674 = vmatprep.subr.mxu0 0.0
    %675 = vmatpush1.msra.mxu0 0.0
    %676 = vmatprep.subr.mxu0 0.0
    %677 = vmatpush1.msra.mxu0 0.0
    %678 = vmatprep.subr.mxu0 0.0
    %679 = vmatpush1.msra.mxu0 0.0
    %680 = vmatprep.subr.mxu0 0.0
    %681 = vmatpush1.msra.mxu0 0.0
    %682 = vmatprep.subr.mxu0 0.0
    %683 = vmatpush1.msra.mxu0 0.0
    %684 = vmatprep.subr.mxu0 0.0
    %685 = vmatpush1.msra.mxu0 0.0
    %686 = vmatprep.subr.mxu0 0.0
    %687 = vmatpush1.msra.mxu0 0.0
    %688 = vmatprep.subr.mxu0 0.0
    %689 = vmatpush1.msra.mxu0 0.0
    %690 = vmatprep.subr.mxu0 0.0
    %691 = vmatpush1.msra.mxu0 0.0
    %692 = vmatprep.subr.mxu0 0.0
    %693 = vmatpush1.msra.mxu0 0.0
    %694 = vmatprep.subr.mxu0 0.0
    %695 = vmatpush1.msra.mxu0 0.0
    %696 = vmatprep.subr.mxu0 0.0
    %697 = vmatpush1.msra.mxu0 0.0
    %698 = vmatprep.subr.mxu0 0.0
    %699 = vmatpush1.msra.mxu0 0.0
    %700 = vmatprep.subr.mxu0 0.0
    %701 = vmatpush1.msra.mxu0 0.0
    %702 = vmatprep.subr.mxu0 0.0
    %703 = vmatpush1.msra.mxu0 0.0
    %704 = vmatprep.subr.mxu0 0.0
    %705 = vmatpush1.msra.mxu0 0.0
    %706 = vmatprep.mubr.f32.mxu0 0.0
    %707 = vmatmul.mubr.f32.gmra.mrb[0].mxu0 %v397
    %v708 = vpop.f32.mrb[0].mxu0
    %v709 = vadd.f32 %v605, %v708
    %v710 = vpop.f32.mrb[0].mxu0
    %v711 = vadd.f32 %v609, %v710
    %712 = vdwg.mxu0
    %713 = vmatprep.subr.mxu0 %v566
    %714 = vmatpush1.msra.mxu0 %v565
    %715 = vmatprep.subr.mxu0 %v574
    %716 = vmatpush1.msra.mxu0 %v573
    %717 = vmatprep.subr.mxu0 %v582
    %718 = vmatpush1.msra.mxu0 %v581
    %719 = vmatprep.subr.mxu0 %v590
    %720 = vmatpush1.msra.mxu0 %v589
    %721 = vmatprep.subr.mxu0 0.0
    %722 = vmatpush1.msra.mxu0 0.0
    %723 = vmatprep.subr.mxu0 0.0
    %724 = vmatpush1.msra.mxu0 0.0
    %725 = vmatprep.subr.mxu0 0.0
    %726 = vmatpush1.msra.mxu0 0.0
    %727 = vmatprep.subr.mxu0 0.0
    %728 = vmatpush1.msra.mxu0 0.0
    %729 = vmatprep.subr.mxu0 0.0
    %730 = vmatpush1.msra.mxu0 0.0
    %731 = vmatprep.subr.mxu0 0.0
    %732 = vmatpush1.msra.mxu0 0.0
    %733 = vmatprep.subr.mxu0 0.0
    %734 = vmatpush1.msra.mxu0 0.0
    %735 = vmatprep.subr.mxu0 0.0
    %736 = vmatpush1.msra.mxu0 0.0
    %737 = vmatprep.subr.mxu0 0.0
    %738 = vmatpush1.msra.mxu0 0.0
    %739 = vmatprep.subr.mxu0 0.0
    %740 = vmatpush1.msra.mxu0 0.0
    %741 = vmatprep.subr.mxu0 0.0
    %742 = vmatpush1.msra.mxu0 0.0
    %743 = vmatprep.subr.mxu0 0.0
    %744 = vmatpush1.msra.mxu0 0.0
    %745 = vmatprep.subr.mxu0 0.0
    %746 = vmatpush1.msra.mxu0 0.0
    %747 = vmatprep.subr.mxu0 0.0
    %748 = vmatpush1.msra.mxu0 0.0
    %749 = vmatprep.subr.mxu0 0.0
    %750 = vmatpush1.msra.mxu0 0.0
    %751 = vmatprep.subr.mxu0 0.0
    %752 = vmatpush1.msra.mxu0 0.0
    %753 = vmatprep.subr.mxu0 0.0
    %754 = vmatpush1.msra.mxu0 0.0
    %755 = vmatprep.subr.mxu0 0.0
    %756 = vmatpush1.msra.mxu0 0.0
    %757 = vmatprep.subr.mxu0 0.0
    %758 = vmatpush1.msra.mxu0 0.0
    %759 = vmatprep.subr.mxu0 0.0
    %760 = vmatpush1.msra.mxu0 0.0
    %761 = vmatprep.subr.mxu0 0.0
    %762 = vmatpush1.msra.mxu0 0.0
    %763 = vmatprep.subr.mxu0 0.0
    %764 = vmatpush1.msra.mxu0 0.0
    %765 = vmatprep.subr.mxu0 0.0
    %766 = vmatpush1.msra.mxu0 0.0
    %767 = vmatprep.subr.mxu0 0.0
    %768 = vmatpush1.msra.mxu0 0.0
    %769 = vmatprep.subr.mxu0 0.0
    %770 = vmatpush1.msra.mxu0 0.0
    %771 = vmatprep.subr.mxu0 0.0
    %772 = vmatpush1.msra.mxu0 0.0
    %773 = vmatprep.subr.mxu0 0.0
    %774 = vmatpush1.msra.mxu0 0.0
    %775 = vmatprep.subr.mxu0 0.0
    %776 = vmatpush1.msra.mxu0 0.0
    %777 = vmatprep.mubr.f32.mxu0 0.0
    %778 = vmatmul.mubr.f32.gmra.mrb[0].mxu0 %v397
    %v779 = vpop.f32.mrb[0].mxu0
    %v780 = vadd.f32 %v613, %v779
    %v781 = vpop.f32.mrb[0].mxu0
    %v782 = vadd.f32 %v617, %v781
    %783 = vdwg.mxu0
    %784 = vmatprep.subr.mxu0 %v568
    %785 = vmatpush1.msra.mxu0 %v567
    %786 = vmatprep.subr.mxu0 %v576
    %787 = vmatpush1.msra.mxu0 %v575
    %788 = vmatprep.subr.mxu0 %v584
    %789 = vmatpush1.msra.mxu0 %v583
    %790 = vmatprep.subr.mxu0 %v592
    %791 = vmatpush1.msra.mxu0 %v591
    %792 = vmatprep.subr.mxu0 0.0
    %793 = vmatpush1.msra.mxu0 0.0
    %794 = vmatprep.subr.mxu0 0.0
    %795 = vmatpush1.msra.mxu0 0.0
    %796 = vmatprep.subr.mxu0 0.0
    %797 = vmatpush1.msra.mxu0 0.0
    %798 = vmatprep.subr.mxu0 0.0
    %799 = vmatpush1.msra.mxu0 0.0
    %800 = vmatprep.subr.mxu0 0.0
    %801 = vmatpush1.msra.mxu0 0.0
    %802 = vmatprep.subr.mxu0 0.0
    %803 = vmatpush1.msra.mxu0 0.0
    %804 = vmatprep.subr.mxu0 0.0
    %805 = vmatpush1.msra.mxu0 0.0
    %806 = vmatprep.subr.mxu0 0.0
    %807 = vmatpush1.msra.mxu0 0.0
    %808 = vmatprep.subr.mxu0 0.0
    %809 = vmatpush1.msra.mxu0 0.0
    %810 = vmatprep.subr.mxu0 0.0
    %811 = vmatpush1.msra.mxu0 0.0
    %812 = vmatprep.subr.mxu0 0.0
    %813 = vmatpush1.msra.mxu0 0.0
    %814 = vmatprep.subr.mxu0 0.0
    %815 = vmatpush1.msra.mxu0 0.0
    %816 = vmatprep.subr.mxu0 0.0
    %817 = vmatpush1.msra.mxu0 0.0
    %818 = vmatprep.subr.mxu0 0.0
    %819 = vmatpush1.msra.mxu0 0.0
    %820 = vmatprep.subr.mxu0 0.0
    %821 = vmatpush1.msra.mxu0 0.0
    %822 = vmatprep.subr.mxu0 0.0
    %823 = vmatpush1.msra.mxu0 0.0
    %824 = vmatprep.subr.mxu0 0.0
    %825 = vmatpush1.msra.mxu0 0.0
    %826 = vmatprep.subr.mxu0 0.0
    %827 = vmatpush1.msra.mxu0 0.0
    %828 = vmatprep.subr.mxu0 0.0
    %829 = vmatpush1.msra.mxu0 0.0
    %830 = vmatprep.subr.mxu0 0.0
    %831 = vmatpush1.msra.mxu0 0.0
    %832 = vmatprep.subr.mxu0 0.0
    %833 = vmatpush1.msra.mxu0 0.0
    %834 = vmatprep.subr.mxu0 0.0
    %835 = vmatpush1.msra.mxu0 0.0
    %836 = vmatprep.subr.mxu0 0.0
    %837 = vmatpush1.msra.mxu0 0.0
    %838 = vmatprep.subr.mxu0 0.0
    %839 = vmatpush1.msra.mxu0 0.0
    %840 = vmatprep.subr.mxu0 0.0
    %841 = vmatpush1.msra.mxu0 0.0
    %842 = vmatprep.subr.mxu0 0.0
    %843 = vmatpush1.msra.mxu0 0.0
    %844 = vmatprep.subr.mxu0 0.0
    %845 = vmatpush1.msra.mxu0 0.0
    %846 = vmatprep.subr.mxu0 0.0
    %847 = vmatpush1.msra.mxu0 0.0
    %848 = vmatprep.mubr.f32.mxu0 0.0
    %849 = vmatmul.mubr.f32.gmra.mrb[0].mxu0 %v397
    %v850 = vpop.f32.mrb[0].mxu0
    %v851 = vadd.f32 %v621, %v850
    %v852 = vpop.f32.mrb[0].mxu0
    %v853 = vadd.f32 %v625, %v852
    %854 = vdwg.mxu0
    %855 = vmatprep.subr.mxu0 %v570
    %856 = vmatpush1.msra.mxu0 %v569
    %857 = vmatprep.subr.mxu0 %v578
    %858 = vmatpush1.msra.mxu0 %v577
    %859 = vmatprep.subr.mxu0 %v586
    %860 = vmatpush1.msra.mxu0 %v585
    %861 = vmatprep.subr.mxu0 %v594
    %862 = vmatpush1.msra.mxu0 %v593
    %863 = vmatprep.subr.mxu0 0.0
    %864 = vmatpush1.msra.mxu0 0.0
    %865 = vmatprep.subr.mxu0 0.0
    %866 = vmatpush1.msra.mxu0 0.0
    %867 = vmatprep.subr.mxu0 0.0
    %868 = vmatpush1.msra.mxu0 0.0
    %869 = vmatprep.subr.mxu0 0.0
    %870 = vmatpush1.msra.mxu0 0.0
    %871 = vmatprep.subr.mxu0 0.0
    %872 = vmatpush1.msra.mxu0 0.0
    %873 = vmatprep.subr.mxu0 0.0
    %874 = vmatpush1.msra.mxu0 0.0
    %875 = vmatprep.subr.mxu0 0.0
    %876 = vmatpush1.msra.mxu0 0.0
    %877 = vmatprep.subr.mxu0 0.0
    %878 = vmatpush1.msra.mxu0 0.0
    %879 = vmatprep.subr.mxu0 0.0
    %880 = vmatpush1.msra.mxu0 0.0
    %881 = vmatprep.subr.mxu0 0.0
    %882 = vmatpush1.msra.mxu0 0.0
    %883 = vmatprep.subr.mxu0 0.0
    %884 = vmatpush1.msra.mxu0 0.0
    %885 = vmatprep.subr.mxu0 0.0
    %886 = vmatpush1.msra.mxu0 0.0
    %887 = vmatprep.subr.mxu0 0.0
    %888 = vmatpush1.msra.mxu0 0.0
    %889 = vmatprep.subr.mxu0 0.0
    %890 = vmatpush1.msra.mxu0 0.0
    %891 = vmatprep.subr.mxu0 0.0
    %892 = vmatpush1.msra.mxu0 0.0
    %893 = vmatprep.subr.mxu0 0.0
    %894 = vmatpush1.msra.mxu0 0.0
    %895 = vmatprep.subr.mxu0 0.0
    %896 = vmatpush1.msra.mxu0 0.0
    %897 = vmatprep.subr.mxu0 0.0
    %898 = vmatpush1.msra.mxu0 0.0
    %899 = vmatprep.subr.mxu0 0.0
    %900 = vmatpush1.msra.mxu0 0.0
    %901 = vmatprep.subr.mxu0 0.0
    %902 = vmatpush1.msra.mxu0 0.0
    %903 = vmatprep.subr.mxu0 0.0
    %904 = vmatpush1.msra.mxu0 0.0
    %905 = vmatprep.subr.mxu0 0.0
    %906 = vmatpush1.msra.mxu0 0.0
    %907 = vmatprep.subr.mxu0 0.0
    %908 = vmatpush1.msra.mxu0 0.0
    %909 = vmatprep.subr.mxu0 0.0
    %910 = vmatpush1.msra.mxu0 0.0
    %911 = vmatprep.subr.mxu0 0.0
    %912 = vmatpush1.msra.mxu0 0.0
    %913 = vmatprep.subr.mxu0 0.0
    %914 = vmatpush1.msra.mxu0 0.0
    %915 = vmatprep.subr.mxu0 0.0
    %916 = vmatpush1.msra.mxu0 0.0
    %917 = vmatprep.subr.mxu0 0.0
    %918 = vmatpush1.msra.mxu0 0.0
    %919 = vmatprep.mubr.f32.mxu0 0.0
    %920 = vmatmul.mubr.f32.gmra.mrb[0].mxu0 %v397
    %v921 = vpop.f32.mrb[0].mxu0
    %v922 = vadd.f32 %v629, %v921
    %v923 = vpop.f32.mrb[0].mxu0
    %v924 = vadd.f32 %v633, %v923
    %925 = vdwg.mxu0
    %v927 = vlaneseq
    %v928 = vshrl.u32 %v927, 7
    %v929 = vsub.s32 0, %v928
    %v930 = vrot.slane %v600, %v929
    %932 = vmatprep.subr.mxu0 0.0
    %933 = vmatpush1.msra.mxu0 %v596
    %934 = vmatprep.subr.mxu0 0.0
    %935 = vmatpush1.msra.mxu0 %v597
    %936 = vmatprep.subr.mxu0 0.0
    %937 = vmatpush1.msra.mxu0 %v598
    %938 = vmatprep.subr.mxu0 0.0
    %939 = vmatpush1.msra.mxu0 %v599
    %940 = vmatprep.subr.mxu0 0.0
    %941 = vmatpush1.msra.mxu0 0.0
    %942 = vmatprep.subr.mxu0 0.0
    %943 = vmatpush1.msra.mxu0 0.0
    %944 = vmatprep.subr.mxu0 0.0
    %945 = vmatpush1.msra.mxu0 0.0
    %946 = vmatprep.subr.mxu0 0.0
    %947 = vmatpush1.msra.mxu0 0.0
    %948 = vmatprep.subr.mxu0 0.0
    %949 = vmatpush1.msra.mxu0 0.0
    %950 = vmatprep.subr.mxu0 0.0
    %951 = vmatpush1.msra.mxu0 0.0
    %952 = vmatprep.subr.mxu0 0.0
    %953 = vmatpush1.msra.mxu0 0.0
    %954 = vmatprep.subr.mxu0 0.0
    %955 = vmatpush1.msra.mxu0 0.0
    %956 = vmatprep.subr.mxu0 0.0
    %957 = vmatpush1.msra.mxu0 0.0
    %958 = vmatprep.subr.mxu0 0.0
    %959 = vmatpush1.msra.mxu0 0.0
    %960 = vmatprep.subr.mxu0 0.0
    %961 = vmatpush1.msra.mxu0 0.0
    %962 = vmatprep.subr.mxu0 0.0
    %963 = vmatpush1.msra.mxu0 0.0
    %964 = vmatprep.subr.mxu0 0.0
    %965 = vmatpush1.msra.mxu0 0.0
    %966 = vmatprep.subr.mxu0 0.0
    %967 = vmatpush1.msra.mxu0 0.0
    %968 = vmatprep.subr.mxu0 0.0
    %969 = vmatpush1.msra.mxu0 0.0
    %970 = vmatprep.subr.mxu0 0.0
    %971 = vmatpush1.msra.mxu0 0.0
    %972 = vmatprep.subr.mxu0 0.0
    %973 = vmatpush1.msra.mxu0 0.0
    %974 = vmatprep.subr.mxu0 0.0
    %975 = vmatpush1.msra.mxu0 0.0
    %976 = vmatprep.subr.mxu0 0.0
    %977 = vmatpush1.msra.mxu0 0.0
    %978 = vmatprep.subr.mxu0 0.0
    %979 = vmatpush1.msra.mxu0 0.0
    %980 = vmatprep.subr.mxu0 0.0
    %981 = vmatpush1.msra.mxu0 0.0
    %982 = vmatprep.subr.mxu0 0.0
    %983 = vmatpush1.msra.mxu0 0.0
    %984 = vmatprep.subr.mxu0 0.0
    %985 = vmatpush1.msra.mxu0 0.0
    %986 = vmatprep.subr.mxu0 0.0
    %987 = vmatpush1.msra.mxu0 0.0
    %988 = vmatprep.subr.mxu0 0.0
    %989 = vmatpush1.msra.mxu0 0.0
    %990 = vmatprep.subr.mxu0 0.0
    %991 = vmatpush1.msra.mxu0 0.0
    %992 = vmatprep.subr.mxu0 0.0
    %993 = vmatpush1.msra.mxu0 0.0
    %994 = vmatprep.subr.mxu0 0.0
    %995 = vmatpush1.msra.mxu0 0.0
    %996 = vmatprep.mubr.f32.mxu0 0.0
    %997 = vmatmul.mubr.f32.gmra.mrb[0].mxu0 %v397
    %v998 = vpop.f32.mrb[0].mxu0
    %v999 = vadd.f32 %v930, %v998
    %v1000 = vpop.f32.mrb[0].mxu0
    %1001 = vdwg.mxu0
    %1003 = vset.pattern.permute.xlu0 0
    %1004 = vperm.xlu0 %1003, %v562
    %v1005 = vpop.permute.xlu0 %1004
    %v1007 = vmul.f32 %v1005, %v709
    %v1008 = vadd.f32 %v999, %v1007
    %1009 = vset.pattern.permute.xlu0 1
    %1010 = vperm.xlu0 %1009, %v562
    %v1011 = vpop.permute.xlu0 %1010
    %v1013 = vmul.f32 %v1011, %v709
    %1015 = vrot.lane.b32.xlu0 %v1013, 96
    %v1016 = vpop.permute.xlu0 %1015
    %v1018 = vadd.f32 %v1008, %v1016
    %1019 = vset.pattern.permute.xlu0 2
    %1020 = vperm.xlu0 %1019, %v562
    %v1021 = vpop.permute.xlu0 %1020
    %v1023 = vmul.f32 %v1021, %v709
    %1025 = vrot.lane.b32.xlu0 %v1023, 64
    %v1026 = vpop.permute.xlu0 %1025
    %v1028 = vadd.f32 %v1018, %v1026
    %1029 = vset.pattern.permute.xlu0 3
    %1030 = vperm.xlu0 %1029, %v562
    %v1031 = vpop.permute.xlu0 %1030
    %v1033 = vmul.f32 %v1031, %v709
    %1035 = vrot.lane.b32.xlu0 %v1033, 32
    %v1036 = vpop.permute.xlu0 %1035
    %v1038 = vadd.f32 %v1028, %v1036
    %1039 = vset.pattern.permute.xlu0 4
    %1040 = vperm.xlu0 %1039, %v562
    %v1041 = vpop.permute.xlu0 %1040
    %v1043 = vmul.f32 %v1041, %v711
    %v1044 = vadd.f32 %v1038, %v1043
    %1045 = vset.pattern.permute.xlu0 5
    %1046 = vperm.xlu0 %1045, %v562
    %v1047 = vpop.permute.xlu0 %1046
    %v1049 = vmul.f32 %v1047, %v711
    %1051 = vrot.lane.b32.xlu0 %v1049, 96
    %v1052 = vpop.permute.xlu0 %1051
    %v1054 = vadd.f32 %v1044, %v1052
    %1055 = vset.pattern.permute.xlu0 6
    %1056 = vperm.xlu0 %1055, %v562
    %v1057 = vpop.permute.xlu0 %1056
    %v1059 = vmul.f32 %v1057, %v711
    %1061 = vrot.lane.b32.xlu0 %v1059, 64
    %v1062 = vpop.permute.xlu0 %1061
    %v1064 = vadd.f32 %v1054, %v1062
    %1065 = vset.pattern.permute.xlu0 7
    %1066 = vperm.xlu0 %1065, %v562
    %v1067 = vpop.permute.xlu0 %1066
    %v1069 = vmul.f32 %v1067, %v711
    %1071 = vrot.lane.b32.xlu0 %v1069, 32
    %v1072 = vpop.permute.xlu0 %1071
    %v1074 = vadd.f32 %v1064, %v1072
    %1075 = vset.pattern.permute.xlu0 8
    %1076 = vperm.xlu0 %1075, %v562
    %v1077 = vpop.permute.xlu0 %1076
    %v1079 = vmul.f32 %v1077, %v780
    %v1080 = vadd.f32 %v1074, %v1079
    %1081 = vset.pattern.permute.xlu0 9
    %1082 = vperm.xlu0 %1081, %v562
    %v1083 = vpop.permute.xlu0 %1082
    %v1085 = vmul.f32 %v1083, %v780
    %1087 = vrot.lane.b32.xlu0 %v1085, 96
    %v1088 = vpop.permute.xlu0 %1087
    %v1090 = vadd.f32 %v1080, %v1088
    %1091 = vset.pattern.permute.xlu0 10
    %1092 = vperm.xlu0 %1091, %v562
    %v1093 = vpop.permute.xlu0 %1092
    %v1095 = vmul.f32 %v1093, %v780
    %1097 = vrot.lane.b32.xlu0 %v1095, 64
    %v1098 = vpop.permute.xlu0 %1097
    %v1100 = vadd.f32 %v1090, %v1098
    %1101 = vset.pattern.permute.xlu0 11
    %1102 = vperm.xlu0 %1101, %v562
    %v1103 = vpop.permute.xlu0 %1102
    %v1105 = vmul.f32 %v1103, %v780
    %1107 = vrot.lane.b32.xlu0 %v1105, 32
    %v1108 = vpop.permute.xlu0 %1107
    %v1110 = vadd.f32 %v1100, %v1108
    %1111 = vset.pattern.permute.xlu0 12
    %1112 = vperm.xlu0 %1111, %v562
    %v1113 = vpop.permute.xlu0 %1112
    %v1115 = vmul.f32 %v1113, %v782
    %v1116 = vadd.f32 %v1110, %v1115
    %1117 = vset.pattern.permute.xlu0 13
    %1118 = vperm.xlu0 %1117, %v562
    %v1119 = vpop.permute.xlu0 %1118
    %v1121 = vmul.f32 %v1119, %v782
    %1123 = vrot.lane.b32.xlu0 %v1121, 96
    %v1124 = vpop.permute.xlu0 %1123
    %v1126 = vadd.f32 %v1116, %v1124
    %1127 = vset.pattern.permute.xlu0 14
    %1128 = vperm.xlu0 %1127, %v562
    %v1129 = vpop.permute.xlu0 %1128
    %v1131 = vmul.f32 %v1129, %v782
    %1133 = vrot.lane.b32.xlu0 %v1131, 64
    %v1134 = vpop.permute.xlu0 %1133
    %v1136 = vadd.f32 %v1126, %v1134
    %1137 = vset.pattern.permute.xlu0 15
    %1138 = vperm.xlu0 %1137, %v562
    %v1139 = vpop.permute.xlu0 %1138
    %v1141 = vmul.f32 %v1139, %v782
    %1143 = vrot.lane.b32.xlu0 %v1141, 32
    %v1144 = vpop.permute.xlu0 %1143
    %v1146 = vadd.f32 %v1136, %v1144
    %1147 = vset.pattern.permute.xlu0 16
    %1148 = vperm.xlu0 %1147, %v562
    %v1149 = vpop.permute.xlu0 %1148
    %v1151 = vmul.f32 %v1149, %v851
    %v1152 = vadd.f32 %v1146, %v1151
    %1153 = vset.pattern.permute.xlu0 17
    %1154 = vperm.xlu0 %1153, %v562
    %v1155 = vpop.permute.xlu0 %1154
    %v1157 = vmul.f32 %v1155, %v851
    %1159 = vrot.lane.b32.xlu0 %v1157, 96
    %v1160 = vpop.permute.xlu0 %1159
    %v1162 = vadd.f32 %v1152, %v1160
    %1163 = vset.pattern.permute.xlu0 18
    %1164 = vperm.xlu0 %1163, %v562
    %v1165 = vpop.permute.xlu0 %1164
    %v1167 = vmul.f32 %v1165, %v851
    %1169 = vrot.lane.b32.xlu0 %v1167, 64
    %v1170 = vpop.permute.xlu0 %1169
    %v1172 = vadd.f32 %v1162, %v1170
    %1173 = vset.pattern.permute.xlu0 19
    %1174 = vperm.xlu0 %1173, %v562
    %v1175 = vpop.permute.xlu0 %1174
    %v1177 = vmul.f32 %v1175, %v851
    %1179 = vrot.lane.b32.xlu0 %v1177, 32
    %v1180 = vpop.permute.xlu0 %1179
    %v1182 = vadd.f32 %v1172, %v1180
    %1183 = vset.pattern.permute.xlu0 20
    %1184 = vperm.xlu0 %1183, %v562
    %v1185 = vpop.permute.xlu0 %1184
    %v1187 = vmul.f32 %v1185, %v853
    %v1188 = vadd.f32 %v1182, %v1187
    %1189 = vset.pattern.permute.xlu0 21
    %1190 = vperm.xlu0 %1189, %v562
    %v1191 = vpop.permute.xlu0 %1190
    %v1193 = vmul.f32 %v1191, %v853
    %1195 = vrot.lane.b32.xlu0 %v1193, 96
    %v1196 = vpop.permute.xlu0 %1195
    %v1198 = vadd.f32 %v1188, %v1196
    %1199 = vset.pattern.permute.xlu0 22
    %1200 = vperm.xlu0 %1199, %v562
    %v1201 = vpop.permute.xlu0 %1200
    %v1203 = vmul.f32 %v1201, %v853
    %1205 = vrot.lane.b32.xlu0 %v1203, 64
    %v1206 = vpop.permute.xlu0 %1205
    %v1208 = vadd.f32 %v1198, %v1206
    %1209 = vset.pattern.permute.xlu0 23
    %1210 = vperm.xlu0 %1209, %v562
    %v1211 = vpop.permute.xlu0 %1210
    %v1213 = vmul.f32 %v1211, %v853
    %1215 = vrot.lane.b32.xlu0 %v1213, 32
    %v1216 = vpop.permute.xlu0 %1215
    %v1218 = vadd.f32 %v1208, %v1216
    %1219 = vset.pattern.permute.xlu0 24
    %1220 = vperm.xlu0 %1219, %v562
    %v1221 = vpop.permute.xlu0 %1220
    %v1223 = vmul.f32 %v1221, %v922
    %v1224 = vadd.f32 %v1218, %v1223
    %1225 = vset.pattern.permute.xlu0 25
    %1226 = vperm.xlu0 %1225, %v562
    %v1227 = vpop.permute.xlu0 %1226
    %v1229 = vmul.f32 %v1227, %v922
    %1231 = vrot.lane.b32.xlu0 %v1229, 96
    %v1232 = vpop.permute.xlu0 %1231
    %v1234 = vadd.f32 %v1224, %v1232
    %1235 = vset.pattern.permute.xlu0 26
    %1236 = vperm.xlu0 %1235, %v562
    %v1237 = vpop.permute.xlu0 %1236
    %v1239 = vmul.f32 %v1237, %v922
    %1241 = vrot.lane.b32.xlu0 %v1239, 64
    %v1242 = vpop.permute.xlu0 %1241
    %v1244 = vadd.f32 %v1234, %v1242
    %1245 = vset.pattern.permute.xlu0 27
    %1246 = vperm.xlu0 %1245, %v562
    %v1247 = vpop.permute.xlu0 %1246
    %v1249 = vmul.f32 %v1247, %v922
    %1251 = vrot.lane.b32.xlu0 %v1249, 32
    %v1252 = vpop.permute.xlu0 %1251
    %v1254 = vadd.f32 %v1244, %v1252
    %1255 = vset.pattern.permute.xlu0 28
    %1256 = vperm.xlu0 %1255, %v562
    %v1257 = vpop.permute.xlu0 %1256
    %v1259 = vmul.f32 %v1257, %v924
    %v1260 = vadd.f32 %v1254, %v1259
    %1261 = vset.pattern.permute.xlu0 29
    %1262 = vperm.xlu0 %1261, %v562
    %v1263 = vpop.permute.xlu0 %1262
    %v1265 = vmul.f32 %v1263, %v924
    %1267 = vrot.lane.b32.xlu0 %v1265, 96
    %v1268 = vpop.permute.xlu0 %1267
    %v1270 = vadd.f32 %v1260, %v1268
    %1271 = vset.pattern.permute.xlu0 30
    %1272 = vperm.xlu0 %1271, %v562
    %v1273 = vpop.permute.xlu0 %1272
    %v1275 = vmul.f32 %v1273, %v924
    %1277 = vrot.lane.b32.xlu0 %v1275, 64
    %v1278 = vpop.permute.xlu0 %1277
    %v1280 = vadd.f32 %v1270, %v1278
    %1281 = vset.pattern.permute.xlu0 31
    %1282 = vperm.xlu0 %1281, %v562
    %v1283 = vpop.permute.xlu0 %1282
    %v1285 = vmul.f32 %v1283, %v924
    %1287 = vrot.lane.b32.xlu0 %v1285, 32
    %v1288 = vpop.permute.xlu0 %1287
    %v1290 = vadd.f32 %v1280, %v1288
    %v1291 = vtanh.pop %v1290
    %v1292 = vld [vmem:[%s14] sm:$0xff]
    %v1293 = vld [vmem:[%s14 + $0x8] sm:$0xff]
    %v1294 = vld [vmem:[%s14 + $0x10] sm:$0xff]
    %v1295 = vld [vmem:[%s14 + $0x18] sm:$0xff]
    %v1296 = vld [vmem:[%s14 + $0x20] sm:$0xff]
    %v1297 = vld [vmem:[%s14 + $0x28] sm:$0xff]
    %v1298 = vld [vmem:[%s14 + $0x30] sm:$0xff]
    %v1299 = vld [vmem:[%s14 + $0x38] sm:$0xff]
    %v1300 = vld [vmem:[%s14 + $0x40] sm:$0xff]
    %v1301 = vld [vmem:[%s14 + $0x48] sm:$0xff]
    %v1302 = vld [vmem:[%s14 + $0x50] sm:$0xff]
    %v1303 = vld [vmem:[%s14 + $0x58] sm:$0xff]
    %v1304 = vld [vmem:[%s14 + $0x60] sm:$0xff]
    %v1305 = vld [vmem:[%s14 + $0x68] sm:$0xff]
    %v1306 = vld [vmem:[%s14 + $0x70] sm:$0xff]
    %v1307 = vld [vmem:[%s14 + $0x78] sm:$0xff]
    %v1308 = vld [vmem:[#allocation17] sm:$0xf]
    %v1309 = vld [vmem:[%s16] sm:$0xff]
    %v1310 = vld [vmem:[%s16 + $0x8] sm:$0xff]
    %v1311 = vld [vmem:[%s16 + $0x10] sm:$0xff]
    %v1312 = vld [vmem:[%s16 + $0x18] sm:$0xff]
    %v1313 = vld [vmem:[#allocation19] sm:$0x1]
    %v1315 = vlaneseq
    %v1316 = vshrl.u32 %v1315, 7
    %v1317 = vsub.s32 0, %v1316
    %v1318 = vrot.slane %v1308, %v1317
    %v1319 = vlaneseq
    %v1320 = vshrl.u32 %v1319, 7
    %v1321 = vsub.s32 1, %v1320
    %v1322 = vrot.slane %v1308, %v1321
    %v1323 = vlaneseq
    %v1324 = vshrl.u32 %v1323, 7
    %v1325 = vsub.s32 2, %v1324
    %v1326 = vrot.slane %v1308, %v1325
    %v1327 = vlaneseq
    %v1328 = vshrl.u32 %v1327, 7
    %v1329 = vsub.s32 3, %v1328
    %v1330 = vrot.slane %v1308, %v1329
    %1335 = vmatprep.subr.mxu0 %v1293
    %1336 = vmatpush1.msra.mxu0 %v1292
    %1337 = vmatprep.subr.mxu0 %v1297
    %1338 = vmatpush1.msra.mxu0 %v1296
    %1339 = vmatprep.subr.mxu0 %v1301
    %1340 = vmatpush1.msra.mxu0 %v1300
    %1341 = vmatprep.subr.mxu0 %v1305
    %1342 = vmatpush1.msra.mxu0 %v1304
    %1343 = vmatprep.subr.mxu0 0.0
    %1344 = vmatpush1.msra.mxu0 0.0
    %1345 = vmatprep.subr.mxu0 0.0
    %1346 = vmatpush1.msra.mxu0 0.0
    %1347 = vmatprep.subr.mxu0 0.0
    %1348 = vmatpush1.msra.mxu0 0.0
    %1349 = vmatprep.subr.mxu0 0.0
    %1350 = vmatpush1.msra.mxu0 0.0
    %1351 = vmatprep.subr.mxu0 0.0
    %1352 = vmatpush1.msra.mxu0 0.0
    %1353 = vmatprep.subr.mxu0 0.0
    %1354 = vmatpush1.msra.mxu0 0.0
    %1355 = vmatprep.subr.mxu0 0.0
    %1356 = vmatpush1.msra.mxu0 0.0
    %1357 = vmatprep.subr.mxu0 0.0
    %1358 = vmatpush1.msra.mxu0 0.0
    %1359 = vmatprep.subr.mxu0 0.0
    %1360 = vmatpush1.msra.mxu0 0.0
    %1361 = vmatprep.subr.mxu0 0.0
    %1362 = vmatpush1.msra.mxu0 0.0
    %1363 = vmatprep.subr.mxu0 0.0
    %1364 = vmatpush1.msra.mxu0 0.0
    %1365 = vmatprep.subr.mxu0 0.0
    %1366 = vmatpush1.msra.mxu0 0.0
    %1367 = vmatprep.subr.mxu0 0.0
    %1368 = vmatpush1.msra.mxu0 0.0
    %1369 = vmatprep.subr.mxu0 0.0
    %1370 = vmatpush1.msra.mxu0 0.0
    %1371 = vmatprep.subr.mxu0 0.0
    %1372 = vmatpush1.msra.mxu0 0.0
    %1373 = vmatprep.subr.mxu0 0.0
    %1374 = vmatpush1.msra.mxu0 0.0
    %1375 = vmatprep.subr.mxu0 0.0
    %1376 = vmatpush1.msra.mxu0 0.0
    %1377 = vmatprep.subr.mxu0 0.0
    %1378 = vmatpush1.msra.mxu0 0.0
    %1379 = vmatprep.subr.mxu0 0.0
    %1380 = vmatpush1.msra.mxu0 0.0
    %1381 = vmatprep.subr.mxu0 0.0
    %1382 = vmatpush1.msra.mxu0 0.0
    %1383 = vmatprep.subr.mxu0 0.0
    %1384 = vmatpush1.msra.mxu0 0.0
    %1385 = vmatprep.subr.mxu0 0.0
    %1386 = vmatpush1.msra.mxu0 0.0
    %1387 = vmatprep.subr.mxu0 0.0
    %1388 = vmatpush1.msra.mxu0 0.0
    %1389 = vmatprep.subr.mxu0 0.0
    %1390 = vmatpush1.msra.mxu0 0.0
    %1391 = vmatprep.subr.mxu0 0.0
    %1392 = vmatpush1.msra.mxu0 0.0
    %1393 = vmatprep.subr.mxu0 0.0
    %1394 = vmatpush1.msra.mxu0 0.0
    %1395 = vmatprep.subr.mxu0 0.0
    %1396 = vmatpush1.msra.mxu0 0.0
    %1397 = vmatprep.subr.mxu0 0.0
    %1398 = vmatpush1.msra.mxu0 0.0
    %1399 = vmatprep.mubr.f32.mxu0 0.0
    %1400 = vmatmul.mubr.f32.gmra.mrb[0].mxu0 %v397
    %v1401 = vpop.f32.mrb[0].mxu0
    %v1402 = vadd.f32 %v1318, %v1401
    %v1403 = vpop.f32.mrb[0].mxu0
    %v1404 = vadd.f32 %v1322, %v1403
    %1405 = vdwg.mxu0
    %1406 = vmatprep.subr.mxu0 %v1295
    %1407 = vmatpush1.msra.mxu0 %v1294
    %1408 = vmatprep.subr.mxu0 %v1299
    %1409 = vmatpush1.msra.mxu0 %v1298
    %1410 = vmatprep.subr.mxu0 %v1303
    %1411 = vmatpush1.msra.mxu0 %v1302
    %1412 = vmatprep.subr.mxu0 %v1307
    %1413 = vmatpush1.msra.mxu0 %v1306
    %1414 = vmatprep.subr.mxu0 0.0
    %1415 = vmatpush1.msra.mxu0 0.0
    %1416 = vmatprep.subr.mxu0 0.0
    %1417 = vmatpush1.msra.mxu0 0.0
    %1418 = vmatprep.subr.mxu0 0.0
    %1419 = vmatpush1.msra.mxu0 0.0
    %1420 = vmatprep.subr.mxu0 0.0
    %1421 = vmatpush1.msra.mxu0 0.0
    %1422 = vmatprep.subr.mxu0 0.0
    %1423 = vmatpush1.msra.mxu0 0.0
    %1424 = vmatprep.subr.mxu0 0.0
    %1425 = vmatpush1.msra.mxu0 0.0
    %1426 = vmatprep.subr.mxu0 0.0
    %1427 = vmatpush1.msra.mxu0 0.0
    %1428 = vmatprep.subr.mxu0 0.0
    %1429 = vmatpush1.msra.mxu0 0.0
    %1430 = vmatprep.subr.mxu0 0.0
    %1431 = vmatpush1.msra.mxu0 0.0
    %1432 = vmatprep.subr.mxu0 0.0
    %1433 = vmatpush1.msra.mxu0 0.0
    %1434 = vmatprep.subr.mxu0 0.0
    %1435 = vmatpush1.msra.mxu0 0.0
    %1436 = vmatprep.subr.mxu0 0.0
    %1437 = vmatpush1.msra.mxu0 0.0
    %1438 = vmatprep.subr.mxu0 0.0
    %1439 = vmatpush1.msra.mxu0 0.0
    %1440 = vmatprep.subr.mxu0 0.0
    %1441 = vmatpush1.msra.mxu0 0.0
    %1442 = vmatprep.subr.mxu0 0.0
    %1443 = vmatpush1.msra.mxu0 0.0
    %1444 = vmatprep.subr.mxu0 0.0
    %1445 = vmatpush1.msra.mxu0 0.0
    %1446 = vmatprep.subr.mxu0 0.0
    %1447 = vmatpush1.msra.mxu0 0.0
    %1448 = vmatprep.subr.mxu0 0.0
    %1449 = vmatpush1.msra.mxu0 0.0
    %1450 = vmatprep.subr.mxu0 0.0
    %1451 = vmatpush1.msra.mxu0 0.0
    %1452 = vmatprep.subr.mxu0 0.0
    %1453 = vmatpush1.msra.mxu0 0.0
    %1454 = vmatprep.subr.mxu0 0.0
    %1455 = vmatpush1.msra.mxu0 0.0
    %1456 = vmatprep.subr.mxu0 0.0
    %1457 = vmatpush1.msra.mxu0 0.0
    %1458 = vmatprep.subr.mxu0 0.0
    %1459 = vmatpush1.msra.mxu0 0.0
    %1460 = vmatprep.subr.mxu0 0.0
    %1461 = vmatpush1.msra.mxu0 0.0
    %1462 = vmatprep.subr.mxu0 0.0
    %1463 = vmatpush1.msra.mxu0 0.0
    %1464 = vmatprep.subr.mxu0 0.0
    %1465 = vmatpush1.msra.mxu0 0.0
    %1466 = vmatprep.subr.mxu0 0.0
    %1467 = vmatpush1.msra.mxu0 0.0
    %1468 = vmatprep.subr.mxu0 0.0
    %1469 = vmatpush1.msra.mxu0 0.0
    %1470 = vmatprep.mubr.f32.mxu0 0.0
    %1471 = vmatmul.mubr.f32.gmra.mrb[0].mxu0 %v397
    %v1472 = vpop.f32.mrb[0].mxu0
    %v1473 = vadd.f32 %v1326, %v1472
    %v1474 = vpop.f32.mrb[0].mxu0
    %v1475 = vadd.f32 %v1330, %v1474
    %1476 = vdwg.mxu0
    %v1478 = vlaneseq
    %v1479 = vshrl.u32 %v1478, 7
    %v1480 = vsub.s32 0, %v1479
    %v1481 = vrot.slane %v1313, %v1480
    %1483 = vmatprep.subr.mxu0 0.0
    %1484 = vmatpush1.msra.mxu0 %v1309
    %1485 = vmatprep.subr.mxu0 0.0
    %1486 = vmatpush1.msra.mxu0 %v1310
    %1487 = vmatprep.subr.mxu0 0.0
    %1488 = vmatpush1.msra.mxu0 %v1311
    %1489 = vmatprep.subr.mxu0 0.0
    %1490 = vmatpush1.msra.mxu0 %v1312
    %1491 = vmatprep.subr.mxu0 0.0
    %1492 = vmatpush1.msra.mxu0 0.0
    %1493 = vmatprep.subr.mxu0 0.0
    %1494 = vmatpush1.msra.mxu0 0.0
    %1495 = vmatprep.subr.mxu0 0.0
    %1496 = vmatpush1.msra.mxu0 0.0
    %1497 = vmatprep.subr.mxu0 0.0
    %1498 = vmatpush1.msra.mxu0 0.0
    %1499 = vmatprep.subr.mxu0 0.0
    %1500 = vmatpush1.msra.mxu0 0.0
    %1501 = vmatprep.subr.mxu0 0.0
    %1502 = vmatpush1.msra.mxu0 0.0
    %1503 = vmatprep.subr.mxu0 0.0
    %1504 = vmatpush1.msra.mxu0 0.0
    %1505 = vmatprep.subr.mxu0 0.0
    %1506 = vmatpush1.msra.mxu0 0.0
    %1507 = vmatprep.subr.mxu0 0.0
    %1508 = vmatpush1.msra.mxu0 0.0
    %1509 = vmatprep.subr.mxu0 0.0
    %1510 = vmatpush1.msra.mxu0 0.0
    %1511 = vmatprep.subr.mxu0 0.0
    %1512 = vmatpush1.msra.mxu0 0.0
    %1513 = vmatprep.subr.mxu0 0.0
    %1514 = vmatpush1.msra.mxu0 0.0
    %1515 = vmatprep.subr.mxu0 0.0
    %1516 = vmatpush1.msra.mxu0 0.0
    %1517 = vmatprep.subr.mxu0 0.0
    %1518 = vmatpush1.msra.mxu0 0.0
    %1519 = vmatprep.subr.mxu0 0.0
    %1520 = vmatpush1.msra.mxu0 0.0
    %1521 = vmatprep.subr.mxu0 0.0
    %1522 = vmatpush1.msra.mxu0 0.0
    %1523 = vmatprep.subr.mxu0 0.0
    %1524 = vmatpush1.msra.mxu0 0.0
    %1525 = vmatprep.subr.mxu0 0.0
    %1526 = vmatpush1.msra.mxu0 0.0
    %1527 = vmatprep.subr.mxu0 0.0
    %1528 = vmatpush1.msra.mxu0 0.0
    %1529 = vmatprep.subr.mxu0 0.0
    %1530 = vmatpush1.msra.mxu0 0.0
    %1531 = vmatprep.subr.mxu0 0.0
    %1532 = vmatpush1.msra.mxu0 0.0
    %1533 = vmatprep.subr.mxu0 0.0
    %1534 = vmatpush1.msra.mxu0 0.0
    %1535 = vmatprep.subr.mxu0 0.0
    %1536 = vmatpush1.msra.mxu0 0.0
    %1537 = vmatprep.subr.mxu0 0.0
    %1538 = vmatpush1.msra.mxu0 0.0
    %1539 = vmatprep.subr.mxu0 0.0
    %1540 = vmatpush1.msra.mxu0 0.0
    %1541 = vmatprep.subr.mxu0 0.0
    %1542 = vmatpush1.msra.mxu0 0.0
    %1543 = vmatprep.subr.mxu0 0.0
    %1544 = vmatpush1.msra.mxu0 0.0
    %1545 = vmatprep.subr.mxu0 0.0
    %1546 = vmatpush1.msra.mxu0 0.0
    %1547 = vmatprep.mubr.f32.mxu0 0.0
    %1548 = vmatmul.mubr.f32.gmra.mrb[0].mxu0 %v397
    %v1549 = vpop.f32.mrb[0].mxu0
    %v1550 = vadd.f32 %v1481, %v1549
    %v1551 = vpop.f32.mrb[0].mxu0
    %1552 = vdwg.mxu0
    %1554 = vset.pattern.permute.xlu0 0
    %1555 = vperm.xlu0 %1554, %v1291
    %v1556 = vpop.permute.xlu0 %1555
    %v1558 = vmul.f32 %v1556, %v1402
    %v1559 = vadd.f32 %v1550, %v1558
    %1560 = vset.pattern.permute.xlu0 1
    %1561 = vperm.xlu0 %1560, %v1291
    %v1562 = vpop.permute.xlu0 %1561
    %v1564 = vmul.f32 %v1562, %v1402
    %1566 = vrot.lane.b32.xlu0 %v1564, 112
    %v1567 = vpop.permute.xlu0 %1566
    %v1569 = vadd.f32 %v1559, %v1567
    %1570 = vset.pattern.permute.xlu0 2
    %1571 = vperm.xlu0 %1570, %v1291
    %v1572 = vpop.permute.xlu0 %1571
    %v1574 = vmul.f32 %v1572, %v1402
    %1576 = vrot.lane.b32.xlu0 %v1574, 96
    %v1577 = vpop.permute.xlu0 %1576
    %v1579 = vadd.f32 %v1569, %v1577
    %1580 = vset.pattern.permute.xlu0 3
    %1581 = vperm.xlu0 %1580, %v1291
    %v1582 = vpop.permute.xlu0 %1581
    %v1584 = vmul.f32 %v1582, %v1402
    %1586 = vrot.lane.b32.xlu0 %v1584, 80
    %v1587 = vpop.permute.xlu0 %1586
    %v1589 = vadd.f32 %v1579, %v1587
    %1590 = vset.pattern.permute.xlu0 4
    %1591 = vperm.xlu0 %1590, %v1291
    %v1592 = vpop.permute.xlu0 %1591
    %v1594 = vmul.f32 %v1592, %v1402
    %1596 = vrot.lane.b32.xlu0 %v1594, 64
    %v1597 = vpop.permute.xlu0 %1596
    %v1599 = vadd.f32 %v1589, %v1597
    %1600 = vset.pattern.permute.xlu0 5
    %1601 = vperm.xlu0 %1600, %v1291
    %v1602 = vpop.permute.xlu0 %1601
    %v1604 = vmul.f32 %v1602, %v1402
    %1606 = vrot.lane.b32.xlu0 %v1604, 48
    %v1607 = vpop.permute.xlu0 %1606
    %v1609 = vadd.f32 %v1599, %v1607
    %1610 = vset.pattern.permute.xlu0 6
    %1611 = vperm.xlu0 %1610, %v1291
    %v1612 = vpop.permute.xlu0 %1611
    %v1614 = vmul.f32 %v1612, %v1402
    %1616 = vrot.lane.b32.xlu0 %v1614, 32
    %v1617 = vpop.permute.xlu0 %1616
    %v1619 = vadd.f32 %v1609, %v1617
    %1620 = vset.pattern.permute.xlu0 7
    %1621 = vperm.xlu0 %1620, %v1291
    %v1622 = vpop.permute.xlu0 %1621
    %v1624 = vmul.f32 %v1622, %v1402
    %1626 = vrot.lane.b32.xlu0 %v1624, 16
    %v1627 = vpop.permute.xlu0 %1626
    %v1629 = vadd.f32 %v1619, %v1627
    %1630 = vset.pattern.permute.xlu0 8
    %1631 = vperm.xlu0 %1630, %v1291
    %v1632 = vpop.permute.xlu0 %1631
    %v1634 = vmul.f32 %v1632, %v1404
    %v1635 = vadd.f32 %v1629, %v1634
    %1636 = vset.pattern.permute.xlu0 9
    %1637 = vperm.xlu0 %1636, %v1291
    %v1638 = vpop.permute.xlu0 %1637
    %v1640 = vmul.f32 %v1638, %v1404
    %1642 = vrot.lane.b32.xlu0 %v1640, 112
    %v1643 = vpop.permute.xlu0 %1642
    %v1645 = vadd.f32 %v1635, %v1643
    %1646 = vset.pattern.permute.xlu0 10
    %1647 = vperm.xlu0 %1646, %v1291
    %v1648 = vpop.permute.xlu0 %1647
    %v1650 = vmul.f32 %v1648, %v1404
    %1652 = vrot.lane.b32.xlu0 %v1650, 96
    %v1653 = vpop.permute.xlu0 %1652
    %v1655 = vadd.f32 %v1645, %v1653
    %1656 = vset.pattern.permute.xlu0 11
    %1657 = vperm.xlu0 %1656, %v1291
    %v1658 = vpop.permute.xlu0 %1657
    %v1660 = vmul.f32 %v1658, %v1404
    %1662 = vrot.lane.b32.xlu0 %v1660, 80
    %v1663 = vpop.permute.xlu0 %1662
    %v1665 = vadd.f32 %v1655, %v1663
    %1666 = vset.pattern.permute.xlu0 12
    %1667 = vperm.xlu0 %1666, %v1291
    %v1668 = vpop.permute.xlu0 %1667
    %v1670 = vmul.f32 %v1668, %v1404
    %1672 = vrot.lane.b32.xlu0 %v1670, 64
    %v1673 = vpop.permute.xlu0 %1672
    %v1675 = vadd.f32 %v1665, %v1673
    %1676 = vset.pattern.permute.xlu0 13
    %1677 = vperm.xlu0 %1676, %v1291
    %v1678 = vpop.permute.xlu0 %1677
    %v1680 = vmul.f32 %v1678, %v1404
    %1682 = vrot.lane.b32.xlu0 %v1680, 48
    %v1683 = vpop.permute.xlu0 %1682
    %v1685 = vadd.f32 %v1675, %v1683
    %1686 = vset.pattern.permute.xlu0 14
    %1687 = vperm.xlu0 %1686, %v1291
    %v1688 = vpop.permute.xlu0 %1687
    %v1690 = vmul.f32 %v1688, %v1404
    %1692 = vrot.lane.b32.xlu0 %v1690, 32
    %v1693 = vpop.permute.xlu0 %1692
    %v1695 = vadd.f32 %v1685, %v1693
    %1696 = vset.pattern.permute.xlu0 15
    %1697 = vperm.xlu0 %1696, %v1291
    %v1698 = vpop.permute.xlu0 %1697
    %v1700 = vmul.f32 %v1698, %v1404
    %1702 = vrot.lane.b32.xlu0 %v1700, 16
    %v1703 = vpop.permute.xlu0 %1702
    %v1705 = vadd.f32 %v1695, %v1703
    %1706 = vset.pattern.permute.xlu0 16
    %1707 = vperm.xlu0 %1706, %v1291
    %v1708 = vpop.permute.xlu0 %1707
    %v1710 = vmul.f32 %v1708, %v1473
    %v1711 = vadd.f32 %v1705, %v1710
    %1712 = vset.pattern.permute.xlu0 17
    %1713 = vperm.xlu0 %1712, %v1291
    %v1714 = vpop.permute.xlu0 %1713
    %v1716 = vmul.f32 %v1714, %v1473
    %1718 = vrot.lane.b32.xlu0 %v1716, 112
    %v1719 = vpop.permute.xlu0 %1718
    %v1721 = vadd.f32 %v1711, %v1719
    %1722 = vset.pattern.permute.xlu0 18
    %1723 = vperm.xlu0 %1722, %v1291
    %v1724 = vpop.permute.xlu0 %1723
    %v1726 = vmul.f32 %v1724, %v1473
    %1728 = vrot.lane.b32.xlu0 %v1726, 96
    %v1729 = vpop.permute.xlu0 %1728
    %v1731 = vadd.f32 %v1721, %v1729
    %1732 = vset.pattern.permute.xlu0 19
    %1733 = vperm.xlu0 %1732, %v1291
    %v1734 = vpop.permute.xlu0 %1733
    %v1736 = vmul.f32 %v1734, %v1473
    %1738 = vrot.lane.b32.xlu0 %v1736, 80
    %v1739 = vpop.permute.xlu0 %1738
    %v1741 = vadd.f32 %v1731, %v1739
    %1742 = vset.pattern.permute.xlu0 20
    %1743 = vperm.xlu0 %1742, %v1291
    %v1744 = vpop.permute.xlu0 %1743
    %v1746 = vmul.f32 %v1744, %v1473
    %1748 = vrot.lane.b32.xlu0 %v1746, 64
    %v1749 = vpop.permute.xlu0 %1748
    %v1751 = vadd.f32 %v1741, %v1749
    %1752 = vset.pattern.permute.xlu0 21
    %1753 = vperm.xlu0 %1752, %v1291
    %v1754 = vpop.permute.xlu0 %1753
    %v1756 = vmul.f32 %v1754, %v1473
    %1758 = vrot.lane.b32.xlu0 %v1756, 48
    %v1759 = vpop.permute.xlu0 %1758
    %v1761 = vadd.f32 %v1751, %v1759
    %1762 = vset.pattern.permute.xlu0 22
    %1763 = vperm.xlu0 %1762, %v1291
    %v1764 = vpop.permute.xlu0 %1763
    %v1766 = vmul.f32 %v1764, %v1473
    %1768 = vrot.lane.b32.xlu0 %v1766, 32
    %v1769 = vpop.permute.xlu0 %1768
    %v1771 = vadd.f32 %v1761, %v1769
    %1772 = vset.pattern.permute.xlu0 23
    %1773 = vperm.xlu0 %1772, %v1291
    %v1774 = vpop.permute.xlu0 %1773
    %v1776 = vmul.f32 %v1774, %v1473
    %1778 = vrot.lane.b32.xlu0 %v1776, 16
    %v1779 = vpop.permute.xlu0 %1778
    %v1781 = vadd.f32 %v1771, %v1779
    %1782 = vset.pattern.permute.xlu0 24
    %1783 = vperm.xlu0 %1782, %v1291
    %v1784 = vpop.permute.xlu0 %1783
    %v1786 = vmul.f32 %v1784, %v1475
    %v1787 = vadd.f32 %v1781, %v1786
    %1788 = vset.pattern.permute.xlu0 25
    %1789 = vperm.xlu0 %1788, %v1291
    %v1790 = vpop.permute.xlu0 %1789
    %v1792 = vmul.f32 %v1790, %v1475
    %1794 = vrot.lane.b32.xlu0 %v1792, 112
    %v1795 = vpop.permute.xlu0 %1794
    %v1797 = vadd.f32 %v1787, %v1795
    %1798 = vset.pattern.permute.xlu0 26
    %1799 = vperm.xlu0 %1798, %v1291
    %v1800 = vpop.permute.xlu0 %1799
    %v1802 = vmul.f32 %v1800, %v1475
    %1804 = vrot.lane.b32.xlu0 %v1802, 96
    %v1805 = vpop.permute.xlu0 %1804
    %v1807 = vadd.f32 %v1797, %v1805
    %1808 = vset.pattern.permute.xlu0 27
    %1809 = vperm.xlu0 %1808, %v1291
    %v1810 = vpop.permute.xlu0 %1809
    %v1812 = vmul.f32 %v1810, %v1475
    %1814 = vrot.lane.b32.xlu0 %v1812, 80
    %v1815 = vpop.permute.xlu0 %1814
    %v1817 = vadd.f32 %v1807, %v1815
    %1818 = vset.pattern.permute.xlu0 28
    %1819 = vperm.xlu0 %1818, %v1291
    %v1820 = vpop.permute.xlu0 %1819
    %v1822 = vmul.f32 %v1820, %v1475
    %1824 = vrot.lane.b32.xlu0 %v1822, 64
    %v1825 = vpop.permute.xlu0 %1824
    %v1827 = vadd.f32 %v1817, %v1825
    %1828 = vset.pattern.permute.xlu0 29
    %1829 = vperm.xlu0 %1828, %v1291
    %v1830 = vpop.permute.xlu0 %1829
    %v1832 = vmul.f32 %v1830, %v1475
    %1834 = vrot.lane.b32.xlu0 %v1832, 48
    %v1835 = vpop.permute.xlu0 %1834
    %v1837 = vadd.f32 %v1827, %v1835
    %1838 = vset.pattern.permute.xlu0 30
    %1839 = vperm.xlu0 %1838, %v1291
    %v1840 = vpop.permute.xlu0 %1839
    %v1842 = vmul.f32 %v1840, %v1475
    %1844 = vrot.lane.b32.xlu0 %v1842, 32
    %v1845 = vpop.permute.xlu0 %1844
    %v1847 = vadd.f32 %v1837, %v1845
    %1848 = vset.pattern.permute.xlu0 31
    %1849 = vperm.xlu0 %1848, %v1291
    %v1850 = vpop.permute.xlu0 %1849
    %v1852 = vmul.f32 %v1850, %v1475
    %1854 = vrot.lane.b32.xlu0 %v1852, 16
    %v1855 = vpop.permute.xlu0 %1854
    %v1857 = vadd.f32 %v1847, %v1855
    %v1858 = vtanh.pop %v1857
    %v1859 = vld [vmem:[%s18] sm:$0xff]
    %v1860 = vld [vmem:[%s18 + $0x8] sm:$0xff]
    %v1861 = vld [vmem:[%s18 + $0x10] sm:$0xff]
    %v1862 = vld [vmem:[%s18 + $0x18] sm:$0xff]
    %v1863 = vld [vmem:[%s19] sm:$0x1]
    %v1864 = vld [vmem:[%s20] sm:$0xff]
    %v1865 = vld [vmem:[%s20 + $0x8] sm:$0xff]
    %v1866 = vld [vmem:[%s20 + $0x10] sm:$0xff]
    %v1867 = vld [vmem:[%s20 + $0x18] sm:$0xff]
    %v1868 = vld [vmem:[#allocation2] sm:$0x1]
    %v1870 = vlaneseq
    %v1871 = vshrl.u32 %v1870, 7
    %v1872 = vsub.s32 0, %v1871
    %v1873 = vrot.slane %v1863, %v1872
    %1875 = vmatprep.subr.mxu0 0.0
    %1876 = vmatpush1.msra.mxu0 %v1859
    %1877 = vmatprep.subr.mxu0 0.0
    %1878 = vmatpush1.msra.mxu0 %v1860
    %1879 = vmatprep.subr.mxu0 0.0
    %1880 = vmatpush1.msra.mxu0 %v1861
    %1881 = vmatprep.subr.mxu0 0.0
    %1882 = vmatpush1.msra.mxu0 %v1862
    %1883 = vmatprep.subr.mxu0 0.0
    %1884 = vmatpush1.msra.mxu0 0.0
    %1885 = vmatprep.subr.mxu0 0.0
    %1886 = vmatpush1.msra.mxu0 0.0
    %1887 = vmatprep.subr.mxu0 0.0
    %1888 = vmatpush1.msra.mxu0 0.0
    %1889 = vmatprep.subr.mxu0 0.0
    %1890 = vmatpush1.msra.mxu0 0.0
    %1891 = vmatprep.subr.mxu0 0.0
    %1892 = vmatpush1.msra.mxu0 0.0
    %1893 = vmatprep.subr.mxu0 0.0
    %1894 = vmatpush1.msra.mxu0 0.0
    %1895 = vmatprep.subr.mxu0 0.0
    %1896 = vmatpush1.msra.mxu0 0.0
    %1897 = vmatprep.subr.mxu0 0.0
    %1898 = vmatpush1.msra.mxu0 0.0
    %1899 = vmatprep.subr.mxu0 0.0
    %1900 = vmatpush1.msra.mxu0 0.0
    %1901 = vmatprep.subr.mxu0 0.0
    %1902 = vmatpush1.msra.mxu0 0.0
    %1903 = vmatprep.subr.mxu0 0.0
    %1904 = vmatpush1.msra.mxu0 0.0
    %1905 = vmatprep.subr.mxu0 0.0
    %1906 = vmatpush1.msra.mxu0 0.0
    %1907 = vmatprep.subr.mxu0 0.0
    %1908 = vmatpush1.msra.mxu0 0.0
    %1909 = vmatprep.subr.mxu0 0.0
    %1910 = vmatpush1.msra.mxu0 0.0
    %1911 = vmatprep.subr.mxu0 0.0
    %1912 = vmatpush1.msra.mxu0 0.0
    %1913 = vmatprep.subr.mxu0 0.0
    %1914 = vmatpush1.msra.mxu0 0.0
    %1915 = vmatprep.subr.mxu0 0.0
    %1916 = vmatpush1.msra.mxu0 0.0
    %1917 = vmatprep.subr.mxu0 0.0
    %1918 = vmatpush1.msra.mxu0 0.0
    %1919 = vmatprep.subr.mxu0 0.0
    %1920 = vmatpush1.msra.mxu0 0.0
    %1921 = vmatprep.subr.mxu0 0.0
    %1922 = vmatpush1.msra.mxu0 0.0
    %1923 = vmatprep.subr.mxu0 0.0
    %1924 = vmatpush1.msra.mxu0 0.0
    %1925 = vmatprep.subr.mxu0 0.0
    %1926 = vmatpush1.msra.mxu0 0.0
    %1927 = vmatprep.subr.mxu0 0.0
    %1928 = vmatpush1.msra.mxu0 0.0
    %1929 = vmatprep.subr.mxu0 0.0
    %1930 = vmatpush1.msra.mxu0 0.0
    %1931 = vmatprep.subr.mxu0 0.0
    %1932 = vmatpush1.msra.mxu0 0.0
    %1933 = vmatprep.subr.mxu0 0.0
    %1934 = vmatpush1.msra.mxu0 0.0
    %1935 = vmatprep.subr.mxu0 0.0
    %1936 = vmatpush1.msra.mxu0 0.0
    %1937 = vmatprep.subr.mxu0 0.0
    %1938 = vmatpush1.msra.mxu0 0.0
    %1939 = vmatprep.mubr.f32.mxu0 0.0
    %1940 = vmatmul.mubr.f32.gmra.mrb[0].mxu0 %v397
    %v1941 = vpop.f32.mrb[0].mxu0
    %v1942 = vadd.f32 %v1873, %v1941
    %v1943 = vpop.f32.mrb[0].mxu0
    %1944 = vdwg.mxu0
    %v1946 = vlaneseq
    %v1947 = vshrl.u32 %v1946, 7
    %v1948 = vsub.s32 0, %v1947
    %v1949 = vrot.slane %v1868, %v1948
    %1951 = vmatprep.subr.mxu0 0.0
    %1952 = vmatpush1.msra.mxu0 %v1864
    %1953 = vmatprep.subr.mxu0 0.0
    %1954 = vmatpush1.msra.mxu0 %v1865
    %1955 = vmatprep.subr.mxu0 0.0
    %1956 = vmatpush1.msra.mxu0 %v1866
    %1957 = vmatprep.subr.mxu0 0.0
    %1958 = vmatpush1.msra.mxu0 %v1867
    %1959 = vmatprep.subr.mxu0 0.0
    %1960 = vmatpush1.msra.mxu0 0.0
    %1961 = vmatprep.subr.mxu0 0.0
    %1962 = vmatpush1.msra.mxu0 0.0
    %1963 = vmatprep.subr.mxu0 0.0
    %1964 = vmatpush1.msra.mxu0 0.0
    %1965 = vmatprep.subr.mxu0 0.0
    %1966 = vmatpush1.msra.mxu0 0.0
    %1967 = vmatprep.subr.mxu0 0.0
    %1968 = vmatpush1.msra.mxu0 0.0
    %1969 = vmatprep.subr.mxu0 0.0
    %1970 = vmatpush1.msra.mxu0 0.0
    %1971 = vmatprep.subr.mxu0 0.0
    %1972 = vmatpush1.msra.mxu0 0.0
    %1973 = vmatprep.subr.mxu0 0.0
    %1974 = vmatpush1.msra.mxu0 0.0
    %1975 = vmatprep.subr.mxu0 0.0
    %1976 = vmatpush1.msra.mxu0 0.0
    %1977 = vmatprep.subr.mxu0 0.0
    %1978 = vmatpush1.msra.mxu0 0.0
    %1979 = vmatprep.subr.mxu0 0.0
    %1980 = vmatpush1.msra.mxu0 0.0
    %1981 = vmatprep.subr.mxu0 0.0
    %1982 = vmatpush1.msra.mxu0 0.0
    %1983 = vmatprep.subr.mxu0 0.0
    %1984 = vmatpush1.msra.mxu0 0.0
    %1985 = vmatprep.subr.mxu0 0.0
    %1986 = vmatpush1.msra.mxu0 0.0
    %1987 = vmatprep.subr.mxu0 0.0
    %1988 = vmatpush1.msra.mxu0 0.0
    %1989 = vmatprep.subr.mxu0 0.0
    %1990 = vmatpush1.msra.mxu0 0.0
    %1991 = vmatprep.subr.mxu0 0.0
    %1992 = vmatpush1.msra.mxu0 0.0
    %1993 = vmatprep.subr.mxu0 0.0
    %1994 = vmatpush1.msra.mxu0 0.0
    %1995 = vmatprep.subr.mxu0 0.0
    %1996 = vmatpush1.msra.mxu0 0.0
    %1997 = vmatprep.subr.mxu0 0.0
    %1998 = vmatpush1.msra.mxu0 0.0
    %1999 = vmatprep.subr.mxu0 0.0
    %2000 = vmatpush1.msra.mxu0 0.0
    %2001 = vmatprep.subr.mxu0 0.0
    %2002 = vmatpush1.msra.mxu0 0.0
    %2003 = vmatprep.subr.mxu0 0.0
    %2004 = vmatpush1.msra.mxu0 0.0
    %2005 = vmatprep.subr.mxu0 0.0
    %2006 = vmatpush1.msra.mxu0 0.0
    %2007 = vmatprep.subr.mxu0 0.0
    %2008 = vmatpush1.msra.mxu0 0.0
    %2009 = vmatprep.subr.mxu0 0.0
    %2010 = vmatpush1.msra.mxu0 0.0
    %2011 = vmatprep.subr.mxu0 0.0
    %2012 = vmatpush1.msra.mxu0 0.0
    %2013 = vmatprep.subr.mxu0 0.0
    %2014 = vmatpush1.msra.mxu0 0.0
    %2015 = vmatprep.mubr.f32.mxu0 0.0
    %2016 = vmatmul.mubr.f32.gmra.mrb[0].mxu0 %v397
    %v2017 = vpop.f32.mrb[0].mxu0
    %v2018 = vadd.f32 %v1949, %v2017
    %v2019 = vpop.f32.mrb[0].mxu0
    %2020 = vdwg.mxu0
    %v2021 = vmul.f32 %v1858, %v1942
    %v2022 = vadd.f32 %v2018, %v2021
    %2024 = vrot.lane.b32.xlu0 %v2021, 127
    %v2025 = vpop.permute.xlu0 %2024
    %v2027 = vadd.f32 %v2022, %v2025
    %2028 = vrot.lane.b32.xlu0 %v2021, 126
    %v2029 = vpop.permute.xlu0 %2028
    %v2031 = vadd.f32 %v2027, %v2029
    %2032 = vrot.lane.b32.xlu0 %v2021, 125
    %v2033 = vpop.permute.xlu0 %2032
    %v2035 = vadd.f32 %v2031, %v2033
    %2036 = vrot.lane.b32.xlu0 %v2021, 124
    %v2037 = vpop.permute.xlu0 %2036
    %v2039 = vadd.f32 %v2035, %v2037
    %2040 = vrot.lane.b32.xlu0 %v2021, 123
    %v2041 = vpop.permute.xlu0 %2040
    %v2043 = vadd.f32 %v2039, %v2041
    %2044 = vrot.lane.b32.xlu0 %v2021, 122
    %v2045 = vpop.permute.xlu0 %2044
    %v2047 = vadd.f32 %v2043, %v2045
    %2048 = vrot.lane.b32.xlu0 %v2021, 121
    %v2049 = vpop.permute.xlu0 %2048
    %v2051 = vadd.f32 %v2047, %v2049
    %2052 = vrot.lane.b32.xlu0 %v2021, 120
    %v2053 = vpop.permute.xlu0 %2052
    %v2055 = vadd.f32 %v2051, %v2053
    %2056 = vrot.lane.b32.xlu0 %v2021, 119
    %v2057 = vpop.permute.xlu0 %2056
    %v2059 = vadd.f32 %v2055, %v2057
    %2060 = vrot.lane.b32.xlu0 %v2021, 118
    %v2061 = vpop.permute.xlu0 %2060
    %v2063 = vadd.f32 %v2059, %v2061
    %2064 = vrot.lane.b32.xlu0 %v2021, 117
    %v2065 = vpop.permute.xlu0 %2064
    %v2067 = vadd.f32 %v2063, %v2065
    %2068 = vrot.lane.b32.xlu0 %v2021, 116
    %v2069 = vpop.permute.xlu0 %2068
    %v2071 = vadd.f32 %v2067, %v2069
    %2072 = vrot.lane.b32.xlu0 %v2021, 115
    %v2073 = vpop.permute.xlu0 %2072
    %v2075 = vadd.f32 %v2071, %v2073
    %2076 = vrot.lane.b32.xlu0 %v2021, 114
    %v2077 = vpop.permute.xlu0 %2076
    %v2079 = vadd.f32 %v2075, %v2077
    %2080 = vrot.lane.b32.xlu0 %v2021, 113
    %v2081 = vpop.permute.xlu0 %2080
    %v2083 = vadd.f32 %v2079, %v2081
    %vm2084 = vcmask 7168
    %2085 = vst.msk [vmem:[%s22] sm:$0xff] %vm2084, %v2083
    // Predicated region
    $region134: #{tpu_custom_call.1} parent=1 // pred_check
      _
    $region135: #{tpu_custom_call.1} parent=1 // pred_check_branch
      %2087 = sbr.rel (0) target = $region137
    $region136: #{tpu_custom_call.1} parent=1 // pred_region
      _
    $region137: #{tpu_custom_call.1} parent=1 // pred_fallthru
      _
    // Predicated region
    $region138: #{tpu_custom_call.1} parent=1 // pred_check
      _
    $region139: #{tpu_custom_call.1} parent=1 // pred_check_branch
      %2089 = sbr.rel (0) target = $region141
    $region140: #{tpu_custom_call.1} parent=1 // pred_region
      _
    $region141: #{tpu_custom_call.1} parent=1 // pred_fallthru
      _
    %2090 = vsyncpa [#allocation4], 1
    %2091 = vsyncpa [#allocation6], 1
    %2092 = vsyncpa [#allocation9], 1
    %2093 = vsyncpa [#allocation12], 1
    %2094 = vsyncpa [#allocation15], 1
    %2095 = vsyncpa [#allocation18], 1

</llo_original>
